<compile_context>
chip_gen: v7x
topology: tpu7x:2x2x1
jax: 0.10.0
libtpu: 0.0.40
codegen_flags: <defaults>
</compile_context>

<pallas_src>
import functools

import jax
import jax.numpy as jnp
from jax.experimental import pallas as pl
from jax.experimental.pallas import tpu as pltpu


def _round_up(x, m):
    return ((x + m - 1) // m) * m


def _pick_tile(size, cap, quantum):
    """Largest multiple-of-`quantum` divisor of `size` that is <= max(cap, quantum).
    `size` must itself be a multiple of `quantum`."""
    t = min(size, max((cap // quantum) * quantum, quantum))
    while size % t != 0:
        t -= quantum
    return t


def _compiler_params(dimension_semantics, est_vmem_bytes):
    kwargs = dict(dimension_semantics=dimension_semantics)
    # Only override the scoped-VMEM limit when the double-buffered working set
    # might exceed v5e's 16 MiB default (harmless / unnecessary otherwise).
    if est_vmem_bytes > 12 * 1024 * 1024:
        kwargs["vmem_limit_bytes"] = int(min(96 * 1024 * 1024, 2 * est_vmem_bytes))
    return pltpu.CompilerParams(**kwargs)


# ------------------------------------------------------------------ linear --
def _linear_k1_kernel(x_ref, w_ref, b_ref, *rest, apply_relu, has_residual):
    """Single-K-tile fast path: no accumulator scratch, no K grid axis.
    bias (+residual) (+ReLU) fused into the MXU epilogue."""
    if has_residual:
        res_ref, o_ref = rest
    else:
        (o_ref,) = rest
    out = jnp.dot(x_ref[...], w_ref[...], preferred_element_type=jnp.float32)
    out = out + b_ref[...]
    if has_residual:
        out = out + res_ref[...].astype(jnp.float32)
    if apply_relu:
        out = jnp.maximum(out, 0.0)
    o_ref[...] = out.astype(o_ref.dtype)


def _linear_kacc_kernel(x_ref, w_ref, b_ref, *rest, apply_relu, has_residual):
    """K-blocked path with a resident f32 VMEM accumulator."""
    if has_residual:
        res_ref, o_ref, acc_ref = rest
    else:
        o_ref, acc_ref = rest
    k = pl.program_id(2)

    @pl.when(k == 0)
    def _():
        acc_ref[...] = jnp.zeros_like(acc_ref)

    acc_ref[...] += jnp.dot(x_ref[...], w_ref[...],
                            preferred_element_type=jnp.float32)

    @pl.when(k == pl.num_programs(2) - 1)
    def _():
        out = acc_ref[...] + b_ref[...]
        if has_residual:
            out = out + res_ref[...].astype(jnp.float32)
        if apply_relu:
            out = jnp.maximum(out, 0.0)
        o_ref[...] = out.astype(o_ref.dtype)


_TM_CAP, _TN_CAP, _TK_CAP = 512, 512, 1024


def _linear_padded(x_p, w_p, b_p, residual_p=None, *, apply_relu=False,
                   out_dtype=None):
    """x_p (Mp,Kp) @ w_p (Kp,Np) + b_p (1,Np) [+ residual_p (Mp,Np)] [-> ReLU].
    All dims pre-padded: Mp%8==0, Kp%128==0, Np%128==0 (done once for weights
    in prepare_params, once per forward for activations)."""
    Mp, Kp = x_p.shape
    Kp_w, Np = w_p.shape
    assert Kp == Kp_w and b_p.shape == (1, Np)
    out_dtype = out_dtype or x_p.dtype
    has_residual = residual_p is not None

    tm = _pick_tile(Mp, _TM_CAP, 8)
    tn = _pick_tile(Np, _TN_CAP, 128)
    tk = _pick_tile(Kp, _TK_CAP, 128)
    # v7x has 2 TensorCores: expose >=2 blocks along a parallel axis if possible.
    if (Mp // tm) * (Np // tn) < 2:
        if Np >= 256:
            tn = _pick_tile(Np, Np // 2, 128)
        elif Mp >= 16:
            tm = _pick_tile(Mp, Mp // 2, 8)

    k_blocked = Kp > tk
    itemsize = lambda d: jnp.dtype(d).itemsize
    est = 2 * (tm * tk * itemsize(x_p.dtype) + tk * tn * itemsize(w_p.dtype)
               + tn * 4 + tm * tn * itemsize(out_dtype))
    if has_residual:
        est += 2 * tm * tn * itemsize(residual_p.dtype)
    if k_blocked:
        est += tm * tn * 4

    if k_blocked:
        grid = (Mp // tm, Np // tn, Kp // tk)
        in_specs = [pl.BlockSpec((tm, tk), lambda i, j, k: (i, k)),
                    pl.BlockSpec((tk, tn), lambda i, j, k: (k, j)),
                    pl.BlockSpec((1, tn), lambda i, j, k: (0, j))]
        if has_residual:
            in_specs.append(pl.BlockSpec((tm, tn), lambda i, j, k: (i, j)))
        out_spec = pl.BlockSpec((tm, tn), lambda i, j, k: (i, j))
        scratch = [pltpu.VMEM((tm, tn), jnp.float32)]
        kernel = functools.partial(_linear_kacc_kernel, apply_relu=apply_relu,
                                   has_residual=has_residual)
        semantics = ("parallel", "parallel", "arbitrary")
    else:
        grid = (Mp // tm, Np // tn)
        in_specs = [pl.BlockSpec((tm, Kp), lambda i, j: (i, 0)),
                    pl.BlockSpec((Kp, tn), lambda i, j: (0, j)),
                    pl.BlockSpec((1, tn), lambda i, j: (0, j))]
        if has_residual:
            in_specs.append(pl.BlockSpec((tm, tn), lambda i, j: (i, j)))
        out_spec = pl.BlockSpec((tm, tn), lambda i, j: (i, j))
        scratch = []
        kernel = functools.partial(_linear_k1_kernel, apply_relu=apply_relu,
                                   has_residual=has_residual)
        semantics = ("parallel", "parallel")

    args = (x_p, w_p, b_p) + ((residual_p,) if has_residual else ())
    return pl.pallas_call(
        kernel,
        out_shape=jax.ShapeDtypeStruct((Mp, Np), out_dtype),
        grid_spec=pltpu.PrefetchScalarGridSpec(
            num_scalar_prefetch=0, grid=grid,
            in_specs=in_specs, out_specs=out_spec, scratch_shapes=scratch),
        compiler_params=_compiler_params(semantics, est),
    )(*args)


# --------------------------------------------------------------- attention --
def _attention_kernel(q_ref, k_ref, v_ref, o_ref, *, true_s):
    # Operands stay in their native (bf16) dtype for the MXU; accumulate f32.
    q = q_ref[...]
    k = k_ref[...]
    # scores = Q @ K^T (contract the feature dim).  The PyTorch module does
    # NOT scale by 1/sqrt(d) and does NOT split heads, so neither do we.
    scores = jax.lax.dot_general(q, k, (((1,), (1,)), ((), ())),
                                 preferred_element_type=jnp.float32)
    if true_s != scores.shape[-1]:
        key_idx = jax.lax.broadcasted_iota(jnp.int32, scores.shape, 1)
        scores = jnp.where(key_idx < true_s, scores, -1e30)  # mask pad keys (f32)
    m = jnp.max(scores, axis=-1, keepdims=True)
    p = jnp.exp(scores - m)
    l = jnp.sum(p, axis=-1, keepdims=True)
    out = jnp.dot(p.astype(v_ref.dtype), v_ref[...],
                  preferred_element_type=jnp.float32)
    # Normalize after @V: S*E multiplies instead of S*S, divide on the EUP.
    out = out * pl.reciprocal(l, approx=True)
    o_ref[...] = out.astype(o_ref.dtype)


def _attention(q, k, v, *, true_s):
    """q, k, v: (B, Sp, Ep) padded; single 'head' over the full embed dim.
    TODO(synk): block flash-style over KV for long sequences (v7x 64 MiB VMEM).
    """
    B, Sp, Ep = q.shape
    spec = pl.BlockSpec((None, Sp, Ep), lambda b: (b, 0, 0))
    est = 8 * Sp * Ep * jnp.dtype(q.dtype).itemsize + Sp * Sp * 4
    return pl.pallas_call(
        functools.partial(_attention_kernel, true_s=true_s),
        out_shape=jax.ShapeDtypeStruct((B, Sp, Ep), q.dtype),
        grid_spec=pltpu.PrefetchScalarGridSpec(
            num_scalar_prefetch=0, grid=(B,),
            in_specs=[spec, spec, spec],
            out_specs=pl.BlockSpec((None, Sp, Ep), lambda b: (b, 0, 0))),
        compiler_params=_compiler_params(("parallel",), est),
    )(q, k, v)


# --------------------------------------------------------------- layernorm --
def _layernorm_kernel(x_ref, g_ref, b_ref, o_ref, *, true_e, eps):
    x = x_ref[...].astype(jnp.float32)
    ep = x.shape[-1]
    if true_e != ep:
        lane = jax.lax.broadcasted_iota(jnp.int32, x.shape, 1)
        valid = lane < true_e
        xm = jnp.where(valid, x, 0.0)
    else:
        xm = x
    mean = jnp.sum(xm, axis=-1, keepdims=True) * (1.0 / true_e)
    xc = x - mean
    xcm = jnp.where(valid, xc, 0.0) if true_e != ep else xc
    var = jnp.sum(xcm * xcm, axis=-1, keepdims=True) * (1.0 / true_e)
    y = xc * jax.lax.rsqrt(var + eps)
    # gamma/beta are zero-padded, so padded output lanes come out exactly 0.
    y = y * g_ref[...] + b_ref[...]
    o_ref[...] = y.astype(o_ref.dtype)


def _layernorm_padded(x_p, gamma_p, beta_p, *, true_e, eps=1e-5, out_dtype=None):
    """LayerNorm over the last dim of a lane-dense padded (Mp, Ep) activation."""
    Mp, Ep = x_p.shape
    out_dtype = out_dtype or x_p.dtype
    tm = _pick_tile(Mp, 1024, 8)
    if Mp // tm < 2 and Mp >= 16:        # feed both v7x TensorCores
        tm = _pick_tile(Mp, Mp // 2, 8)
    est = 2 * tm * Ep * (jnp.dtype(x_p.dtype).itemsize
                         + jnp.dtype(out_dtype).itemsize) + 8 * Ep
    return pl.pallas_call(
        functools.partial(_layernorm_kernel, true_e=true_e, eps=eps),
        out_shape=jax.ShapeDtypeStruct((Mp, Ep), out_dtype),
        grid_spec=pltpu.PrefetchScalarGridSpec(
            num_scalar_prefetch=0, grid=(Mp // tm,),
            in_specs=[pl.BlockSpec((tm, Ep), lambda i: (i, 0)),
                      pl.BlockSpec((1, Ep), lambda i: (0, 0)),
                      pl.BlockSpec((1, Ep), lambda i: (0, 0))],
            out_specs=pl.BlockSpec((tm, Ep), lambda i: (i, 0))),
        compiler_params=_compiler_params(("parallel",), est),
    )(x_p, gamma_p, beta_p)


# ---------------------------------------------------------- parameter prep --
def prepare_params(p, *, compute_dtype=jnp.bfloat16):
    """One-time prep: zero-pad every weight to lane-dense (multiple-of-128)
    shapes, cast MXU operands to bf16, keep biases / LN affine in f32, and
    fuse [wq|wk|wv] into a single wide matmul.  Zero padding keeps padded
    lanes exactly 0 end-to-end."""
    E = p["wq"].shape[0]
    F = p["w1"].shape[1]
    Ep = _round_up(E, 128)
    Fp = _round_up(F, 128)

    def pw(w, kp, np_):
        return jnp.pad(w, ((0, kp - w.shape[0]),
                           (0, np_ - w.shape[1]))).astype(compute_dtype)

    def pv(b, np_):      # f32 row vector, zero padded
        return jnp.pad(b, (0, np_ - b.shape[0])).astype(jnp.float32).reshape(1, np_)

    return {
        "w_qkv": jnp.concatenate([pw(p["wq"], Ep, Ep), pw(p["wk"], Ep, Ep),
                                  pw(p["wv"], Ep, Ep)], axis=1),
        "b_qkv": jnp.concatenate([pv(p["bq"], Ep), pv(p["bk"], Ep),
                                  pv(p["bv"], Ep)], axis=1),
        "wo": pw(p["wo"], Ep, Ep), "bo": pv(p["bo"], Ep),
        "w1": pw(p["w1"], Ep, Fp), "b1": pv(p["b1"], Fp),
        "w2": pw(p["w2"], Fp, Ep), "b2": pv(p["b2"], Ep),
        "g1": pv(p["g1"], Ep), "beta1": pv(p["beta1"], Ep),
        "g2": pv(p["g2"], Ep), "beta2": pv(p["beta2"], Ep),
    }


# ------------------------------------------------------------- full layer ---
def transformer_layer_forward(src, prep):
    """src: [B, S, E] float; prep: output of prepare_params()."""
    w_qkv = prep["w_qkv"]
    cd = w_qkv.dtype
    Ep = prep["wo"].shape[0]
    B, S, E = src.shape
    M = B * S
    Mp = _round_up(M, 8)
    Sp = _round_up(S, 8)

    # Activations stay padded / lane-dense and in the compute dtype between
    # kernels; only the activations are padded per call (weights done once).
    src_p = jnp.pad(src.astype(cd).reshape(M, E), ((0, Mp - M), (0, Ep - E)))

    # Fused Q/K/V projection: one pallas_call reads src once.
    qkv = _linear_padded(src_p, w_qkv, prep["b_qkv"], out_dtype=cd)  # (Mp, 3*Ep)
    q_p, k_p, v_p = (qkv[:, i * Ep:(i + 1) * Ep] for i in range(3))

    def batched(a):      # (Mp, Ep) -> (B, Sp, Ep)
        a = a[:M].reshape(B, S, Ep)
        return a if Sp == S else jnp.pad(a, ((0, 0), (0, Sp - S), (0, 0)))

    attn = _attention(batched(q_p), batched(k_p), batched(v_p), true_s=S)
    attn_p = attn[:, :S].reshape(M, Ep)
    if Mp != M:
        attn_p = jnp.pad(attn_p, ((0, Mp - M), (0, 0)))

    # Out-projection with the residual add fused into its epilogue.
    # TODO(synk): dropout is stochastic -> inference-mode identity here.
    x1 = _linear_padded(attn_p, prep["wo"], prep["bo"], residual_p=src_p,
                        out_dtype=cd)
    x1 = _layernorm_padded(x1, prep["g1"], prep["beta1"], true_e=E, out_dtype=cd)

    ff = _linear_padded(x1, prep["w1"], prep["b1"], apply_relu=True, out_dtype=cd)
    x2 = _linear_padded(ff, prep["w2"], prep["b2"], residual_p=x1, out_dtype=cd)
    out = _layernorm_padded(x2, prep["g2"], prep["beta2"], true_e=E,
                            out_dtype=src.dtype)
    return out[:M, :E].reshape(B, S, E)


# ------------------------------------------------------------- reference ----
def _reference_forward(src, p, eps=1e-5, compute_dtype=jnp.float32):
    """Pure-JAX reference.  With compute_dtype=bf16 it mirrors the kernels'
    precision policy (bf16 operands / storage, f32 accumulation & softmax/LN);
    with f32 it is the exact module semantics."""
    cd = compute_dtype

    def q(x):            # emulate operand/storage rounding
        return x.astype(cd).astype(jnp.float32)

    def lin(x, w, b):
        return jnp.dot(q(x), w.astype(cd).astype(jnp.float32),
                       preferred_element_type=jnp.float32) + b

    def ln(x, g, b):
        mean = x.mean(-1, keepdims=True)
        var = ((x - mean) ** 2).mean(-1, keepdims=True)
        return (x - mean) / jnp.sqrt(var + eps) * g + b

    src32 = src.astype(jnp.float32)
    Q = lin(src32, p["wq"], p["bq"])
    K = lin(src32, p["wk"], p["bk"])
    V = lin(src32, p["wv"], p["bv"])
    scores = jnp.einsum("bse,bte->bst", q(Q), q(K),
                        preferred_element_type=jnp.float32)
    w = jax.nn.softmax(scores, axis=2)
    attn = jnp.einsum("bst,bte->bse", q(w), q(V),
                      preferred_element_type=jnp.float32)
    attn_out = lin(attn, p["wo"], p["bo"])
    x = ln(q(attn_out + q(src32)), p["g1"], p["beta1"])
    ff = jnp.maximum(lin(x, p["w1"], p["b1"]), 0.0)
    ff2 = lin(ff, p["w2"], p["b2"])
    return ln(q(ff2 + q(x)), p["g2"], p["beta2"])


if __name__ == "__main__":
    # embed_dim=32, dim_feedforward=64, batch=2, seq=8
    # (num_heads is unused by the original module's forward pass)
    B, S, E, F = 2, 8, 32, 64

    key = jax.random.PRNGKey(0)
    keys = jax.random.split(key, 17)

    def nrm(k, shape, scale=0.1):
        return (scale * jax.random.normal(k, shape)).astype(jnp.float32)

    # NOTE: the PyTorch module initializes every parameter to 1 (degenerate);
    # deterministic random params give a meaningful numerical check.
    src = nrm(keys[0], (B, S, E), 1.0)
    params = {
        "wq": nrm(keys[1], (E, E)), "bq": nrm(keys[2], (E,)),
        "wk": nrm(keys[3], (E, E)), "bk": nrm(keys[4], (E,)),
        "wv": nrm(keys[5], (E, E)), "bv": nrm(keys[6], (E,)),
        "wo": nrm(keys[7], (E, E)), "bo": nrm(keys[8], (E,)),
        "w1": nrm(keys[9], (E, F)), "b1": nrm(keys[10], (F,)),
        "w2": nrm(keys[11], (F, E)), "b2": nrm(keys[12], (E,)),
        "g1": 1.0 + nrm(keys[13], (E,)), "beta1": nrm(keys[14], (E,)),
        "g2": 1.0 + nrm(keys[15], (E,)), "beta2": nrm(keys[16], (E,)),
    }

    prep = prepare_params(params, compute_dtype=jnp.bfloat16)
    fwd = jax.jit(transformer_layer_forward)
    out = fwd(src, prep)
    jax.block_until_ready(out)
    assert out.shape == (B, S, E)

    # Strict check vs. a reference that mirrors the bf16-operand policy.
    ref_bf16 = _reference_forward(src, params, compute_dtype=jnp.bfloat16)
    err_bf16 = float(jnp.max(jnp.abs(out - ref_bf16)))
    assert jnp.allclose(out, ref_bf16, atol=2e-2, rtol=2e-2), err_bf16

    # Sanity check vs. the exact f32 module semantics (bf16-sized slack).
    ref_f32 = _reference_forward(src, params, compute_dtype=jnp.float32)
    err_f32 = float(jnp.max(jnp.abs(out - ref_f32)))
    assert jnp.allclose(out, ref_f32, atol=2.5e-1, rtol=1e-1), err_f32

    print("KERNEL_OK")
</pallas_src>

<mosaic_0001>
module attributes {stable_mosaic.version = 11 : i64} {
  func.func @_linear_k1_kernel(%arg0: i32, %arg1: i32, %arg2: memref<16x128xbf16, #tpu.memory_space<vmem>>, %arg3: memref<128x128xbf16, #tpu.memory_space<vmem>>, %arg4: memref<1x128xf32, #tpu.memory_space<vmem>>, %arg5: memref<16x128xbf16, #tpu.memory_space<vmem>>) attributes {dimension_semantics = [#tpu.dimension_semantics<parallel>, #tpu.dimension_semantics<parallel>], iteration_bounds = array<i64: 1, 3>, scalar_prefetch = 0 : i64, scratch_operands = 0 : i64, tpu.core_type = #tpu.core_type<tc>, window_params = [{transform_indices = @transform_0, window_bounds = array<i64: 16, 128>}, {transform_indices = @transform_1, window_bounds = array<i64: 128, 128>}, {transform_indices = @transform_2, window_bounds = array<i64: 1, 128>}, {transform_indices = @transform_3, window_bounds = array<i64: 16, 128>}]} {
    %c0 = arith.constant 0 : index
    %c0_0 = arith.constant 0 : index
    %0 = vector.load %arg2[%c0, %c0_0] : memref<16x128xbf16, #tpu.memory_space<vmem>>, vector<16x128xbf16>
    %c0_1 = arith.constant 0 : index
    %c0_2 = arith.constant 0 : index
    %1 = vector.load %arg3[%c0_1, %c0_2] : memref<128x128xbf16, #tpu.memory_space<vmem>>, vector<128x128xbf16>
    %cst = arith.constant dense<0.000000e+00> : vector<16x128xf32>
    %2 = tpu.matmul %0, %1, %cst {dimension_numbers = #tpu.dot_dimension_numbers<[1], [0], [0], [1], [0, 0, 1, 1], [], []>} : vector<16x128xbf16>, vector<128x128xbf16>, vector<16x128xf32> -> vector<16x128xf32>
    %c0_3 = arith.constant 0 : index
    %c0_4 = arith.constant 0 : index
    %3 = vector.load %arg4[%c0_3, %c0_4] : memref<1x128xf32, #tpu.memory_space<vmem>>, vector<1x128xf32>
    %4 = vector.broadcast %3 : vector<1x128xf32> to vector<16x128xf32>
    %5 = arith.addf %2, %4 : vector<16x128xf32>
    %6 = arith.truncf %5 : vector<16x128xf32> to vector<16x128xbf16>
    %c0_5 = arith.constant 0 : index
    %c0_6 = arith.constant 0 : index
    %7 = vector.load %arg5[%c0_5, %c0_6] : memref<16x128xbf16, #tpu.memory_space<vmem>>, vector<16x128xbf16>
    tpu.vector_store %arg5[%c0_5, %c0_6], %6 {strides = array<i32>} : memref<16x128xbf16, #tpu.memory_space<vmem>>, vector<16x128xbf16>,
    return
  }
  func.func @transform_0(%arg0: i32, %arg1: i32) -> (i32, i32) {
    %c0_i32 = arith.constant 0 : i32
    %c0_i32_0 = arith.constant 0 : i32
    return %arg0, %c0_i32 : i32, i32
  }
  func.func @transform_1(%arg0: i32, %arg1: i32) -> (i32, i32) {
    %c0_i32 = arith.constant 0 : i32
    %c0_i32_0 = arith.constant 0 : i32
    return %c0_i32, %arg1 : i32, i32
  }
  func.func @transform_2(%arg0: i32, %arg1: i32) -> (i32, i32) {
    %c0_i32 = arith.constant 0 : i32
    %c0_i32_0 = arith.constant 0 : i32
    return %c0_i32, %arg1 : i32, i32
  }
  func.func @transform_3(%arg0: i32, %arg1: i32) -> (i32, i32) {
    %c0_i32 = arith.constant 0 : i32
    return %arg0, %arg1 : i32, i32
  }
}

module attributes {stable_mosaic.version = 11 : i64} {
  func.func @_layernorm_kernel(%arg0: i32, %arg1: memref<8x128xbf16, #tpu.memory_space<vmem>>, %arg2: memref<1x128xf32, #tpu.memory_space<vmem>>, %arg3: memref<1x128xf32, #tpu.memory_space<vmem>>, %arg4: memref<8x128xbf16, #tpu.memory_space<vmem>>) attributes {dimension_semantics = [#tpu.dimension_semantics<parallel>], iteration_bounds = array<i64: 2>, scalar_prefetch = 0 : i64, scratch_operands = 0 : i64, tpu.core_type = #tpu.core_type<tc>, window_params = [{transform_indices = @transform_0, window_bounds = array<i64: 8, 128>}, {pipeline_mode = #tpu.pipeline_mode<synchronous>, transform_indices = @transform_1, window_bounds = array<i64: 1, 128>}, {pipeline_mode = #tpu.pipeline_mode<synchronous>, transform_indices = @transform_2, window_bounds = array<i64: 1, 128>}, {transform_indices = @transform_3, window_bounds = array<i64: 8, 128>}]} {
    %c0 = arith.constant 0 : index
    %c0_0 = arith.constant 0 : index
    %0 = vector.load %arg1[%c0, %c0_0] : memref<8x128xbf16, #tpu.memory_space<vmem>>, vector<8x128xbf16>
    %1 = arith.extf %0 : vector<8x128xbf16> to vector<8x128xf32>
    %2 = tpu.iota {dimensions = array<i32: 1>} : vector<8x128xi32>
    %c32_i32 = arith.constant 32 : i32
    %3 = vector.broadcast %c32_i32 : i32 to vector<8x128xi32>
    %4 = arith.cmpi slt, %2, %3 : vector<8x128xi32>
    %cst = arith.constant 0.000000e+00 : f32
    %5 = vector.broadcast %cst : f32 to vector<8x128xf32>
    %6 = arith.select %4, %1, %5 : vector<8x128xi1>, vector<8x128xf32>
    %cst_1 = arith.constant dense<0.000000e+00> : vector<8xf32>
    %7 = vector.multi_reduction <add>, %6, %cst_1 [1] : vector<8x128xf32> to vector<8xf32>
    %8 = vector.shape_cast %7 : vector<8xf32> to vector<8x1xf32>
    %cst_2 = arith.constant 3.125000e-02 : f32
    %9 = vector.broadcast %cst_2 : f32 to vector<8x1xf32>
    %10 = arith.mulf %8, %9 : vector<8x1xf32>
    %11 = vector.broadcast %10 : vector<8x1xf32> to vector<8x128xf32>
    %12 = arith.subf %1, %11 : vector<8x128xf32>
    %cst_3 = arith.constant 0.000000e+00 : f32
    %13 = vector.broadcast %cst_3 : f32 to vector<8x128xf32>
    %14 = arith.select %4, %12, %13 : vector<8x128xi1>, vector<8x128xf32>
    %15 = arith.mulf %14, %14 : vector<8x128xf32>
    %cst_4 = arith.constant dense<0.000000e+00> : vector<8xf32>
    %16 = vector.multi_reduction <add>, %15, %cst_4 [1] : vector<8x128xf32> to vector<8xf32>
    %17 = vector.shape_cast %16 : vector<8xf32> to vector<8x1xf32>
    %cst_5 = arith.constant 3.125000e-02 : f32
    %18 = vector.broadcast %cst_5 : f32 to vector<8x1xf32>
    %19 = arith.mulf %17, %18 : vector<8x1xf32>
    %cst_6 = arith.constant 9.99999974E-6 : f32
    %20 = vector.broadcast %cst_6 : f32 to vector<8x1xf32>
    %21 = arith.addf %19, %20 : vector<8x1xf32>
    %22 = math.rsqrt %21 : vector<8x1xf32>
    %23 = vector.broadcast %22 : vector<8x1xf32> to vector<8x128xf32>
    %24 = arith.mulf %12, %23 : vector<8x128xf32>
    %c0_7 = arith.constant 0 : index
    %c0_8 = arith.constant 0 : index
    %25 = vector.load %arg2[%c0_7, %c0_8] : memref<1x128xf32, #tpu.memory_space<vmem>>, vector<1x128xf32>
    %26 = vector.broadcast %25 : vector<1x128xf32> to vector<8x128xf32>
    %27 = arith.mulf %24, %26 : vector<8x128xf32>
    %c0_9 = arith.constant 0 : index
    %c0_10 = arith.constant 0 : index
    %28 = vector.load %arg3[%c0_9, %c0_10] : memref<1x128xf32, #tpu.memory_space<vmem>>, vector<1x128xf32>
    %29 = vector.broadcast %28 : vector<1x128xf32> to vector<8x128xf32>
    %30 = arith.addf %27, %29 : vector<8x128xf32>
    %31 = arith.truncf %30 : vector<8x128xf32> to vector<8x128xbf16>
    %c0_11 = arith.constant 0 : index
    %c0_12 = arith.constant 0 : index
    %32 = vector.load %arg4[%c0_11, %c0_12] : memref<8x128xbf16, #tpu.memory_space<vmem>>, vector<8x128xbf16>
    tpu.vector_store %arg4[%c0_11, %c0_12], %31 {strides = array<i32>} : memref<8x128xbf16, #tpu.memory_space<vmem>>, vector<8x128xbf16>,
    return
  }
  func.func @transform_0(%arg0: i32) -> (i32, i32) {
    %c0_i32 = arith.constant 0 : i32
    %c0_i32_0 = arith.constant 0 : i32
    return %arg0, %c0_i32 : i32, i32
  }
  func.func @transform_1(%arg0: i32) -> (i32, i32) {
    %c0_i32 = arith.constant 0 : i32
    %c0_i32_0 = arith.constant 0 : i32
    %c0_i32_1 = arith.constant 0 : i32
    return %c0_i32, %c0_i32_0 : i32, i32
  }
  func.func @transform_2(%arg0: i32) -> (i32, i32) {
    %c0_i32 = arith.constant 0 : i32
    %c0_i32_0 = arith.constant 0 : i32
    %c0_i32_1 = arith.constant 0 : i32
    return %c0_i32, %c0_i32_0 : i32, i32
  }
  func.func @transform_3(%arg0: i32) -> (i32, i32) {
    %c0_i32 = arith.constant 0 : i32
    %c0_i32_0 = arith.constant 0 : i32
    return %arg0, %c0_i32 : i32, i32
  }
}

module attributes {stable_mosaic.version = 11 : i64} {
  func.func @_attention_kernel(%arg0: i32, %arg1: memref<1x8x128xbf16, #tpu.memory_space<vmem>>, %arg2: memref<1x8x128xbf16, #tpu.memory_space<vmem>>, %arg3: memref<1x8x128xbf16, #tpu.memory_space<vmem>>, %arg4: memref<1x8x128xbf16, #tpu.memory_space<vmem>>) attributes {dimension_semantics = [#tpu.dimension_semantics<parallel>], iteration_bounds = array<i64: 2>, scalar_prefetch = 0 : i64, scratch_operands = 0 : i64, tpu.core_type = #tpu.core_type<tc>, window_params = [{transform_indices = @transform_0, window_bounds = array<i64: 1, 8, 128>}, {transform_indices = @transform_1, window_bounds = array<i64: 1, 8, 128>}, {transform_indices = @transform_2, window_bounds = array<i64: 1, 8, 128>}, {transform_indices = @transform_3, window_bounds = array<i64: 1, 8, 128>}]} {
    %c0 = arith.constant 0 : index
    %c0_0 = arith.constant 0 : index
    %c0_1 = arith.constant 0 : index
    %0 = vector.load %arg1[%c0, %c0_0, %c0_1] : memref<1x8x128xbf16, #tpu.memory_space<vmem>>, vector<1x8x128xbf16>
    %1 = vector.shape_cast %0 : vector<1x8x128xbf16> to vector<8x128xbf16>
    %c0_2 = arith.constant 0 : index
    %c0_3 = arith.constant 0 : index
    %c0_4 = arith.constant 0 : index
    %2 = vector.load %arg2[%c0_2, %c0_3, %c0_4] : memref<1x8x128xbf16, #tpu.memory_space<vmem>>, vector<1x8x128xbf16>
    %3 = vector.shape_cast %2 : vector<1x8x128xbf16> to vector<8x128xbf16>
    %cst = arith.constant dense<0.000000e+00> : vector<8x8xf32>
    %4 = tpu.matmul %1, %3, %cst {dimension_numbers = #tpu.dot_dimension_numbers<[1], [1], [0], [0], [0, 0, 1, 0], [], []>} : vector<8x128xbf16>, vector<8x128xbf16>, vector<8x8xf32> -> vector<8x8xf32>
    %cst_5 = arith.constant dense<0xFF800000> : vector<8xf32>
    %5 = vector.multi_reduction <maximumf>, %4, %cst_5 [1] : vector<8x8xf32> to vector<8xf32>
    %6 = vector.shape_cast %5 : vector<8xf32> to vector<8x1xf32>
    %7 = vector.broadcast %6 : vector<8x1xf32> to vector<8x8xf32>
    %8 = arith.subf %4, %7 : vector<8x8xf32>
    %9 = math.exp %8 : vector<8x8xf32>
    %cst_6 = arith.constant dense<0.000000e+00> : vector<8xf32>
    %10 = vector.multi_reduction <add>, %9, %cst_6 [1] : vector<8x8xf32> to vector<8xf32>
    %11 = vector.shape_cast %10 : vector<8xf32> to vector<8x1xf32>
    %12 = arith.truncf %9 : vector<8x8xf32> to vector<8x8xbf16>
    %c0_7 = arith.constant 0 : index
    %c0_8 = arith.constant 0 : index
    %c0_9 = arith.constant 0 : index
    %13 = vector.load %arg3[%c0_7, %c0_8, %c0_9] : memref<1x8x128xbf16, #tpu.memory_space<vmem>>, vector<1x8x128xbf16>
    %14 = vector.shape_cast %13 : vector<1x8x128xbf16> to vector<8x128xbf16>
    %cst_10 = arith.constant dense<0.000000e+00> : vector<8x128xf32>
    %15 = tpu.matmul %12, %14, %cst_10 {dimension_numbers = #tpu.dot_dimension_numbers<[1], [0], [0], [1], [0, 0, 1, 1], [], []>} : vector<8x8xbf16>, vector<8x128xbf16>, vector<8x128xf32> -> vector<8x128xf32>
    %16 = tpu.reciprocal %11 {approx = true} : vector<8x1xf32> -> vector<8x1xf32>
    %17 = vector.broadcast %16 : vector<8x1xf32> to vector<8x128xf32>
    %18 = arith.mulf %15, %17 : vector<8x128xf32>
    %19 = arith.truncf %18 : vector<8x128xf32> to vector<8x128xbf16>
    %c0_11 = arith.constant 0 : index
    %c0_12 = arith.constant 0 : index
    %c0_13 = arith.constant 0 : index
    %20 = vector.load %arg4[%c0_11, %c0_12, %c0_13] : memref<1x8x128xbf16, #tpu.memory_space<vmem>>, vector<1x8x128xbf16>
    %21 = vector.shape_cast %20 : vector<1x8x128xbf16> to vector<8x128xbf16>
    %22 = vector.shape_cast %19 : vector<8x128xbf16> to vector<1x8x128xbf16>
    tpu.vector_store %arg4[%c0_11, %c0_12, %c0_13], %22 {strides = array<i32>} : memref<1x8x128xbf16, #tpu.memory_space<vmem>>, vector<1x8x128xbf16>,
    return
  }
  func.func @transform_0(%arg0: i32) -> (i32, i32, i32) {
    %c0_i32 = arith.constant 0 : i32
    %c0_i32_0 = arith.constant 0 : i32
    %c0_i32_1 = arith.constant 0 : i32
    return %arg0, %c0_i32, %c0_i32_0 : i32, i32, i32
  }
  func.func @transform_1(%arg0: i32) -> (i32, i32, i32) {
    %c0_i32 = arith.constant 0 : i32
    %c0_i32_0 = arith.constant 0 : i32
    %c0_i32_1 = arith.constant 0 : i32
    return %arg0, %c0_i32, %c0_i32_0 : i32, i32, i32
  }
  func.func @transform_2(%arg0: i32) -> (i32, i32, i32) {
    %c0_i32 = arith.constant 0 : i32
    %c0_i32_0 = arith.constant 0 : i32
    %c0_i32_1 = arith.constant 0 : i32
    return %arg0, %c0_i32, %c0_i32_0 : i32, i32, i32
  }
  func.func @transform_3(%arg0: i32) -> (i32, i32, i32) {
    %c0_i32 = arith.constant 0 : i32
    %c0_i32_0 = arith.constant 0 : i32
    %c0_i32_1 = arith.constant 0 : i32
    return %arg0, %c0_i32, %c0_i32_0 : i32, i32, i32
  }
}

module attributes {stable_mosaic.version = 11 : i64} {
  func.func @_linear_k1_kernel(%arg0: i32, %arg1: i32, %arg2: memref<8x128xbf16, #tpu.memory_space<vmem>>, %arg3: memref<128x128xbf16, #tpu.memory_space<vmem>>, %arg4: memref<1x128xf32, #tpu.memory_space<vmem>>, %arg5: memref<8x128xbf16, #tpu.memory_space<vmem>>, %arg6: memref<8x128xbf16, #tpu.memory_space<vmem>>) attributes {dimension_semantics = [#tpu.dimension_semantics<parallel>, #tpu.dimension_semantics<parallel>], iteration_bounds = array<i64: 2, 1>, scalar_prefetch = 0 : i64, scratch_operands = 0 : i64, tpu.core_type = #tpu.core_type<tc>, window_params = [{transform_indices = @transform_0, window_bounds = array<i64: 8, 128>}, {transform_indices = @transform_1, window_bounds = array<i64: 128, 128>}, {transform_indices = @transform_2, window_bounds = array<i64: 1, 128>}, {transform_indices = @transform_3, window_bounds = array<i64: 8, 128>}, {transform_indices = @transform_4, window_bounds = array<i64: 8, 128>}]} {
    %c0 = arith.constant 0 : index
    %c0_0 = arith.constant 0 : index
    %0 = vector.load %arg2[%c0, %c0_0] : memref<8x128xbf16, #tpu.memory_space<vmem>>, vector<8x128xbf16>
    %c0_1 = arith.constant 0 : index
    %c0_2 = arith.constant 0 : index
    %1 = vector.load %arg3[%c0_1, %c0_2] : memref<128x128xbf16, #tpu.memory_space<vmem>>, vector<128x128xbf16>
    %cst = arith.constant dense<0.000000e+00> : vector<8x128xf32>
    %2 = tpu.matmul %0, %1, %cst {dimension_numbers = #tpu.dot_dimension_numbers<[1], [0], [0], [1], [0, 0, 1, 1], [], []>} : vector<8x128xbf16>, vector<128x128xbf16>, vector<8x128xf32> -> vector<8x128xf32>
    %c0_3 = arith.constant 0 : index
    %c0_4 = arith.constant 0 : index
    %3 = vector.load %arg4[%c0_3, %c0_4] : memref<1x128xf32, #tpu.memory_space<vmem>>, vector<1x128xf32>
    %4 = vector.broadcast %3 : vector<1x128xf32> to vector<8x128xf32>
    %5 = arith.addf %2, %4 : vector<8x128xf32>
    %c0_5 = arith.constant 0 : index
    %c0_6 = arith.constant 0 : index
    %6 = vector.load %arg5[%c0_5, %c0_6] : memref<8x128xbf16, #tpu.memory_space<vmem>>, vector<8x128xbf16>
    %7 = arith.extf %6 : vector<8x128xbf16> to vector<8x128xf32>
    %8 = arith.addf %5, %7 : vector<8x128xf32>
    %9 = arith.truncf %8 : vector<8x128xf32> to vector<8x128xbf16>
    %c0_7 = arith.constant 0 : index
    %c0_8 = arith.constant 0 : index
    %10 = vector.load %arg6[%c0_7, %c0_8] : memref<8x128xbf16, #tpu.memory_space<vmem>>, vector<8x128xbf16>
    tpu.vector_store %arg6[%c0_7, %c0_8], %9 {strides = array<i32>} : memref<8x128xbf16, #tpu.memory_space<vmem>>, vector<8x128xbf16>,
    return
  }
  func.func @transform_0(%arg0: i32, %arg1: i32) -> (i32, i32) {
    %c0_i32 = arith.constant 0 : i32
    %c0_i32_0 = arith.constant 0 : i32
    return %arg0, %c0_i32 : i32, i32
  }
  func.func @transform_1(%arg0: i32, %arg1: i32) -> (i32, i32) {
    %c0_i32 = arith.constant 0 : i32
    %c0_i32_0 = arith.constant 0 : i32
    return %c0_i32, %arg1 : i32, i32
  }
  func.func @transform_2(%arg0: i32, %arg1: i32) -> (i32, i32) {
    %c0_i32 = arith.constant 0 : i32
    %c0_i32_0 = arith.constant 0 : i32
    return %c0_i32, %arg1 : i32, i32
  }
  func.func @transform_3(%arg0: i32, %arg1: i32) -> (i32, i32) {
    %c0_i32 = arith.constant 0 : i32
    return %arg0, %arg1 : i32, i32
  }
  func.func @transform_4(%arg0: i32, %arg1: i32) -> (i32, i32) {
    %c0_i32 = arith.constant 0 : i32
    return %arg0, %arg1 : i32, i32
  }
}

module attributes {stable_mosaic.version = 11 : i64} {
  func.func @_linear_k1_kernel(%arg0: i32, %arg1: i32, %arg2: memref<8x128xbf16, #tpu.memory_space<vmem>>, %arg3: memref<128x128xbf16, #tpu.memory_space<vmem>>, %arg4: memref<1x128xf32, #tpu.memory_space<vmem>>, %arg5: memref<8x128xbf16, #tpu.memory_space<vmem>>) attributes {dimension_semantics = [#tpu.dimension_semantics<parallel>, #tpu.dimension_semantics<parallel>], iteration_bounds = array<i64: 2, 1>, scalar_prefetch = 0 : i64, scratch_operands = 0 : i64, tpu.core_type = #tpu.core_type<tc>, window_params = [{transform_indices = @transform_0, window_bounds = array<i64: 8, 128>}, {transform_indices = @transform_1, window_bounds = array<i64: 128, 128>}, {transform_indices = @transform_2, window_bounds = array<i64: 1, 128>}, {transform_indices = @transform_3, window_bounds = array<i64: 8, 128>}]} {
    %c0 = arith.constant 0 : index
    %c0_0 = arith.constant 0 : index
    %0 = vector.load %arg2[%c0, %c0_0] : memref<8x128xbf16, #tpu.memory_space<vmem>>, vector<8x128xbf16>
    %c0_1 = arith.constant 0 : index
    %c0_2 = arith.constant 0 : index
    %1 = vector.load %arg3[%c0_1, %c0_2] : memref<128x128xbf16, #tpu.memory_space<vmem>>, vector<128x128xbf16>
    %cst = arith.constant dense<0.000000e+00> : vector<8x128xf32>
    %2 = tpu.matmul %0, %1, %cst {dimension_numbers = #tpu.dot_dimension_numbers<[1], [0], [0], [1], [0, 0, 1, 1], [], []>} : vector<8x128xbf16>, vector<128x128xbf16>, vector<8x128xf32> -> vector<8x128xf32>
    %c0_3 = arith.constant 0 : index
    %c0_4 = arith.constant 0 : index
    %3 = vector.load %arg4[%c0_3, %c0_4] : memref<1x128xf32, #tpu.memory_space<vmem>>, vector<1x128xf32>
    %4 = vector.broadcast %3 : vector<1x128xf32> to vector<8x128xf32>
    %5 = arith.addf %2, %4 : vector<8x128xf32>
    %cst_5 = arith.constant 0.000000e+00 : f32
    %6 = vector.broadcast %cst_5 : f32 to vector<8x128xf32>
    %7 = arith.maximumf %5, %6 : vector<8x128xf32>
    %8 = arith.truncf %7 : vector<8x128xf32> to vector<8x128xbf16>
    %c0_6 = arith.constant 0 : index
    %c0_7 = arith.constant 0 : index
    %9 = vector.load %arg5[%c0_6, %c0_7] : memref<8x128xbf16, #tpu.memory_space<vmem>>, vector<8x128xbf16>
    tpu.vector_store %arg5[%c0_6, %c0_7], %8 {strides = array<i32>} : memref<8x128xbf16, #tpu.memory_space<vmem>>, vector<8x128xbf16>,
    return
  }
  func.func @transform_0(%arg0: i32, %arg1: i32) -> (i32, i32) {
    %c0_i32 = arith.constant 0 : i32
    %c0_i32_0 = arith.constant 0 : i32
    return %arg0, %c0_i32 : i32, i32
  }
  func.func @transform_1(%arg0: i32, %arg1: i32) -> (i32, i32) {
    %c0_i32 = arith.constant 0 : i32
    %c0_i32_0 = arith.constant 0 : i32
    return %c0_i32, %arg1 : i32, i32
  }
  func.func @transform_2(%arg0: i32, %arg1: i32) -> (i32, i32) {
    %c0_i32 = arith.constant 0 : i32
    %c0_i32_0 = arith.constant 0 : i32
    return %c0_i32, %arg1 : i32, i32
  }
  func.func @transform_3(%arg0: i32, %arg1: i32) -> (i32, i32) {
    %c0_i32 = arith.constant 0 : i32
    return %arg0, %arg1 : i32, i32
  }
}

module attributes {stable_mosaic.version = 11 : i64} {
  func.func @_layernorm_kernel(%arg0: i32, %arg1: memref<8x128xbf16, #tpu.memory_space<vmem>>, %arg2: memref<1x128xf32, #tpu.memory_space<vmem>>, %arg3: memref<1x128xf32, #tpu.memory_space<vmem>>, %arg4: memref<8x128xf32, #tpu.memory_space<vmem>>) attributes {dimension_semantics = [#tpu.dimension_semantics<parallel>], iteration_bounds = array<i64: 2>, scalar_prefetch = 0 : i64, scratch_operands = 0 : i64, tpu.core_type = #tpu.core_type<tc>, window_params = [{transform_indices = @transform_0, window_bounds = array<i64: 8, 128>}, {pipeline_mode = #tpu.pipeline_mode<synchronous>, transform_indices = @transform_1, window_bounds = array<i64: 1, 128>}, {pipeline_mode = #tpu.pipeline_mode<synchronous>, transform_indices = @transform_2, window_bounds = array<i64: 1, 128>}, {transform_indices = @transform_3, window_bounds = array<i64: 8, 128>}]} {
    %c0 = arith.constant 0 : index
    %c0_0 = arith.constant 0 : index
    %0 = vector.load %arg1[%c0, %c0_0] : memref<8x128xbf16, #tpu.memory_space<vmem>>, vector<8x128xbf16>
    %1 = arith.extf %0 : vector<8x128xbf16> to vector<8x128xf32>
    %2 = tpu.iota {dimensions = array<i32: 1>} : vector<8x128xi32>
    %c32_i32 = arith.constant 32 : i32
    %3 = vector.broadcast %c32_i32 : i32 to vector<8x128xi32>
    %4 = arith.cmpi slt, %2, %3 : vector<8x128xi32>
    %cst = arith.constant 0.000000e+00 : f32
    %5 = vector.broadcast %cst : f32 to vector<8x128xf32>
    %6 = arith.select %4, %1, %5 : vector<8x128xi1>, vector<8x128xf32>
    %cst_1 = arith.constant dense<0.000000e+00> : vector<8xf32>
    %7 = vector.multi_reduction <add>, %6, %cst_1 [1] : vector<8x128xf32> to vector<8xf32>
    %8 = vector.shape_cast %7 : vector<8xf32> to vector<8x1xf32>
    %cst_2 = arith.constant 3.125000e-02 : f32
    %9 = vector.broadcast %cst_2 : f32 to vector<8x1xf32>
    %10 = arith.mulf %8, %9 : vector<8x1xf32>
    %11 = vector.broadcast %10 : vector<8x1xf32> to vector<8x128xf32>
    %12 = arith.subf %1, %11 : vector<8x128xf32>
    %cst_3 = arith.constant 0.000000e+00 : f32
    %13 = vector.broadcast %cst_3 : f32 to vector<8x128xf32>
    %14 = arith.select %4, %12, %13 : vector<8x128xi1>, vector<8x128xf32>
    %15 = arith.mulf %14, %14 : vector<8x128xf32>
    %cst_4 = arith.constant dense<0.000000e+00> : vector<8xf32>
    %16 = vector.multi_reduction <add>, %15, %cst_4 [1] : vector<8x128xf32> to vector<8xf32>
    %17 = vector.shape_cast %16 : vector<8xf32> to vector<8x1xf32>
    %cst_5 = arith.constant 3.125000e-02 : f32
    %18 = vector.broadcast %cst_5 : f32 to vector<8x1xf32>
    %19 = arith.mulf %17, %18 : vector<8x1xf32>
    %cst_6 = arith.constant 9.99999974E-6 : f32
    %20 = vector.broadcast %cst_6 : f32 to vector<8x1xf32>
    %21 = arith.addf %19, %20 : vector<8x1xf32>
    %22 = math.rsqrt %21 : vector<8x1xf32>
    %23 = vector.broadcast %22 : vector<8x1xf32> to vector<8x128xf32>
    %24 = arith.mulf %12, %23 : vector<8x128xf32>
    %c0_7 = arith.constant 0 : index
    %c0_8 = arith.constant 0 : index
    %25 = vector.load %arg2[%c0_7, %c0_8] : memref<1x128xf32, #tpu.memory_space<vmem>>, vector<1x128xf32>
    %26 = vector.broadcast %25 : vector<1x128xf32> to vector<8x128xf32>
    %27 = arith.mulf %24, %26 : vector<8x128xf32>
    %c0_9 = arith.constant 0 : index
    %c0_10 = arith.constant 0 : index
    %28 = vector.load %arg3[%c0_9, %c0_10] : memref<1x128xf32, #tpu.memory_space<vmem>>, vector<1x128xf32>
    %29 = vector.broadcast %28 : vector<1x128xf32> to vector<8x128xf32>
    %30 = arith.addf %27, %29 : vector<8x128xf32>
    %c0_11 = arith.constant 0 : index
    %c0_12 = arith.constant 0 : index
    %31 = vector.load %arg4[%c0_11, %c0_12] : memref<8x128xf32, #tpu.memory_space<vmem>>, vector<8x128xf32>
    tpu.vector_store %arg4[%c0_11, %c0_12], %30 {strides = array<i32>} : memref<8x128xf32, #tpu.memory_space<vmem>>, vector<8x128xf32>,
    return
  }
  func.func @transform_0(%arg0: i32) -> (i32, i32) {
    %c0_i32 = arith.constant 0 : i32
    %c0_i32_0 = arith.constant 0 : i32
    return %arg0, %c0_i32 : i32, i32
  }
  func.func @transform_1(%arg0: i32) -> (i32, i32) {
    %c0_i32 = arith.constant 0 : i32
    %c0_i32_0 = arith.constant 0 : i32
    %c0_i32_1 = arith.constant 0 : i32
    return %c0_i32, %c0_i32_0 : i32, i32
  }
  func.func @transform_2(%arg0: i32) -> (i32, i32) {
    %c0_i32 = arith.constant 0 : i32
    %c0_i32_0 = arith.constant 0 : i32
    %c0_i32_1 = arith.constant 0 : i32
    return %c0_i32, %c0_i32_0 : i32, i32
  }
  func.func @transform_3(%arg0: i32) -> (i32, i32) {
    %c0_i32 = arith.constant 0 : i32
    %c0_i32_0 = arith.constant 0 : i32
    return %arg0, %c0_i32 : i32, i32
  }
}

</mosaic_0001>

<llo_original>
// kernel: transformer_layer_forward.7
$region0: #{transformer_layer_forward.7}
  #allocation0 [shape = 'u32[]', space=smem, size = 0x4, offset = 0x4, fixed_abs, tag = 'smem constant byte address 0x4 - core index']
  #allocation1 [shape = 'u32[144,128]{1,0:T(1,128)}', space=vmem, size = 0x12000, scoped, tag = 'internal scratch']
  %s0 = inlined_call_operand.vmem [shape: bf16[16,128], index: 0, kind: input, shape index: {}]
  %s1 = inlined_call_operand.hbm [shape: bf16[128,384], index: 1, kind: input, shape index: {}]
  %s2 = inlined_call_operand.vmem [shape: f32[1,384], index: 2, kind: input, shape index: {}]
  %s3 = inlined_call_operand.vmem [shape: bf16[16,384], index: 3, kind: output, shape index: {}]
  %s4 = sld [smem:[#allocation0]]
  $region86: #{transformer_layer_forward.7} parent=0
    _
  %s6 = ssub.s32 1, %s4
  %s7 = scalar_select 0, %s6, %s4
  $region1: #{transformer_layer_forward.7} parent=0
    #allocation2 [shape = 'u8[65536]{0}', space=vmem, size = 0x10000, scoped, tag = 'input window, operand 1']
    #allocation3 [shape = 's32[2]{0}', space=sflag, size = 0x8, scoped, tag = 'scoped memory for transformer_layer_forward.7']
    #allocation4 [shape = 'u8[8192]{0}', space=vmem, size = 0x2000, scoped, tag = 'output window, operand 0']
    %8 = vsyncpa [#allocation3], 0
    %s9 = scalar_lea.sflag [#allocation3], 1
    %10 = vsyncpa %s9, 0
    loop: start=0, step=1, limit=5
    $region2: #{transformer_layer_forward.7} parent=1 // loop_pre_header
      _
    $region3: #{transformer_layer_forward.7} parent=1 // loop_header
      %s12 = sphi 0, %s16
      %p13 = scmp.ge.s32.totalorder %s12, 5
      %s19 = sphi 0, %s31
      %s20 = sphi 0, %s27
      %s21 = sphi 0, %s19
      %s22 = sphi 0, %s20
      %s23 = sphi 0, %s21
      %s24 = sphi 0, %s22
      %s34 = sphi 0, %s36
      %s37 = sphi 0, %s34
      %s38 = sphi 0, %s37
      %s54 = sphi 0, %s38
      %s60 = sphi 0, %s62
      %s63 = sphi 0, %s60
      %s64 = sphi 0, %s63
      %s80 = sphi 0, %s64
      %s86 = sphi 0, %s88
      %s89 = sphi 0, %s86
      %s90 = sphi 0, %s89
      %s106 = sphi 0, %s90
      %s114 = sphi 0, %s116
      %s117 = sphi 0, %s114
      %s118 = sphi 0, %s117
      %s134 = sphi 0, %s118
    $region4: #{transformer_layer_forward.7} parent=1 // loop_header_branch
      %15 = sbr.rel (%p13) target = $region8
    $region5: #{transformer_layer_forward.7} parent=1 // loop_body
      %s17 = ssub.s32 %s12, 1
      %s18 = ssub.s32 %s12, 2
      %s25 = sadd.s32 1, %s20
      %p26 = scmp.ge.s32.totalorder %s25, 3
      %s27 = scalar_select %p26, 0, %s25
      %s28 = sadd.s32 1, %s19
      %s29 = scalar_select %p26, %s28, %s19
      %p30 = scmp.ge.s32.totalorder %s29, 1
      %s31 = scalar_select %p30, 0, %s29
      %s32 = ssub.s32 %s19, %s31
      %p33 = scmp.eq.s32.totalorder %s32, 0
      %s35 = sadd.s32 %s34, 1
      %s36 = scalar_select %p33, %s34, %s35
      %p39 = pneg %p33
      %p40 = scmp.eq.s32.totalorder %s12, 2
      %p41 = por %p39, %p40
      %p42 = scmp.ne.s32.totalorder %s34, %s37
      %p43 = scmp.eq.s32.totalorder %s12, 0
      %p44 = por %p42, %p43
      %p45 = scmp.ne.s32.totalorder %s34, %s37
      %p46 = scmp.eq.s32.totalorder %s17, 2
      %p47 = por %p45, %p46
      %p48 = scmp.ne.s32.totalorder %s37, %s38
      %p49 = scmp.eq.s32.totalorder %s17, 0
      %p50 = por %p48, %p49
      %p51 = scmp.ne.s32.totalorder %s37, %s38
      %p52 = scmp.eq.s32.totalorder %s18, 2
      %p53 = por %p51, %p52
      %p55 = scmp.ne.s32.totalorder %s38, %s54
      %p56 = scmp.eq.s32.totalorder %s18, 0
      %p57 = por %p55, %p56
      %s58 = ssub.s32 %s20, %s27
      %p59 = scmp.eq.s32.totalorder %s58, 0
      %s61 = sadd.s32 %s60, 1
      %s62 = scalar_select %p59, %s60, %s61
      %p65 = pneg %p59
      %p66 = scmp.eq.s32.totalorder %s12, 2
      %p67 = por %p65, %p66
      %p68 = scmp.ne.s32.totalorder %s60, %s63
      %p69 = scmp.eq.s32.totalorder %s12, 0
      %p70 = por %p68, %p69
      %p71 = scmp.ne.s32.totalorder %s60, %s63
      %p72 = scmp.eq.s32.totalorder %s17, 2
      %p73 = por %p71, %p72
      %p74 = scmp.ne.s32.totalorder %s63, %s64
      %p75 = scmp.eq.s32.totalorder %s17, 0
      %p76 = por %p74, %p75
      %p77 = scmp.ne.s32.totalorder %s63, %s64
      %p78 = scmp.eq.s32.totalorder %s18, 2
      %p79 = por %p77, %p78
      %p81 = scmp.ne.s32.totalorder %s64, %s80
      %p82 = scmp.eq.s32.totalorder %s18, 0
      %p83 = por %p81, %p82
      %s84 = ssub.s32 %s20, %s27
      %p85 = scmp.eq.s32.totalorder %s84, 0
      %s87 = sadd.s32 %s86, 1
      %s88 = scalar_select %p85, %s86, %s87
      %p91 = pneg %p85
      %p92 = scmp.eq.s32.totalorder %s12, 2
      %p93 = por %p91, %p92
      %p94 = scmp.ne.s32.totalorder %s86, %s89
      %p95 = scmp.eq.s32.totalorder %s12, 0
      %p96 = por %p94, %p95
      %p97 = scmp.ne.s32.totalorder %s86, %s89
      %p98 = scmp.eq.s32.totalorder %s17, 2
      %p99 = por %p97, %p98
      %p100 = scmp.ne.s32.totalorder %s89, %s90
      %p101 = scmp.eq.s32.totalorder %s17, 0
      %p102 = por %p100, %p101
      %p103 = scmp.ne.s32.totalorder %s89, %s90
      %p104 = scmp.eq.s32.totalorder %s18, 2
      %p105 = por %p103, %p104
      %p107 = scmp.ne.s32.totalorder %s90, %s106
      %p108 = scmp.eq.s32.totalorder %s18, 0
      %p109 = por %p107, %p108
      %s110 = ssub.s32 %s19, %s31
      %s111 = ssub.s32 %s20, %s27
      %s112 = sor.u32 %s110, %s111
      %p113 = scmp.eq.s32.totalorder %s112, 0
      %s115 = sadd.s32 %s114, 1
      %s116 = scalar_select %p113, %s114, %s115
      %p119 = pneg %p113
      %p120 = scmp.eq.s32.totalorder %s12, 2
      %p121 = por %p119, %p120
      %p122 = scmp.ne.s32.totalorder %s114, %s117
      %p123 = scmp.eq.s32.totalorder %s12, 0
      %p124 = por %p122, %p123
      %p125 = scmp.ne.s32.totalorder %s114, %s117
      %p126 = scmp.eq.s32.totalorder %s17, 2
      %p127 = por %p125, %p126
      %p128 = scmp.ne.s32.totalorder %s117, %s118
      %p129 = scmp.eq.s32.totalorder %s17, 0
      %p130 = por %p128, %p129
      %p131 = scmp.ne.s32.totalorder %s117, %s118
      %p132 = scmp.eq.s32.totalorder %s18, 2
      %p133 = por %p131, %p132
      %p135 = scmp.ne.s32.totalorder %s118, %s134
      %p136 = scmp.eq.s32.totalorder %s18, 0
      %p137 = por %p135, %p136
      %p138 = scmp.le.s32.totalorder 1, %s12
      %p139 = scmp.lt.s32.totalorder %s12, 4
      %p140 = pnand %p138, %p139
      %p141 = pneg %p140
      // Predicated region
      $region9: #{transformer_layer_forward.7} parent=5 // pred_check
        _
      $region10: #{transformer_layer_forward.7} parent=5 // pred_check_branch
        %143 = sbr.rel (%p140) target = $region12
      $region11: #{transformer_layer_forward.7} parent=5 // pred_region
        %s144 = ssub.s32 %s12, 1
        // Predicated region
        $region13: #{transformer_layer_forward.7} parent=11 // pred_check
          %p145 = pneg %p50
        $region14: #{transformer_layer_forward.7} parent=11 // pred_check_branch
          %147 = sbr.rel (%p145) target = $region16
        $region15: #{transformer_layer_forward.7} parent=11 // pred_region
          %s148 = smul.u32 2, %s21
          %p149 = scmp.lt.s32.totalorder %s148, 1
          %s150 = scalar_select %p149, %s148, 1
          %s151 = smul.addr %s150, 4
          %s152 = scalar_lea.vmem %s0, %s151
          %s153 = smul.u32 2, %s21
        $region16: #{transformer_layer_forward.7} parent=11 // pred_fallthru
          _
      $region12: #{transformer_layer_forward.7} parent=5 // pred_fallthru
        _
      %p154 = scmp.lt.s32.totalorder %s12, 3
      // Predicated region
      $region17: #{transformer_layer_forward.7} parent=5 // pred_check
        %p155 = pneg %p154
      $region18: #{transformer_layer_forward.7} parent=5 // pred_check_branch
        %157 = sbr.rel (%p155) target = $region20
      $region19: #{transformer_layer_forward.7} parent=5 // pred_region
        // Predicated region
        $region21: #{transformer_layer_forward.7} parent=19 // pred_check
          %p158 = pneg %p70
        $region22: #{transformer_layer_forward.7} parent=19 // pred_check_branch
          %160 = sbr.rel (%p158) target = $region24
        $region23: #{transformer_layer_forward.7} parent=19 // pred_region
          %s161 = sand.u32 %s60, 1
          %s162 = scalar_lea.sflag [#allocation3], %s161
          %s163 = sand.u32 %s60, 1
          %s164 = smul.addr %s163, 64
          %s165 = scalar_lea.vmem [#allocation2], %s164
          %s167 = ssub.s32 1024, 1024
          %168 = vsyncadd %s162, %s167
          %s169 = smul.addr %s20, 64
          %s170 = scalar_lea.hbm %s1, %s169
          %s171 = sshll.u32 %s165, 4
          %s172 = int_to_ptr.vmem [resolvable:$true] %s171
          %177 = dma.hbm_to_vmem [thread:$0]  %s170, 1024, %s172, %s162, 192, 64, 4
        $region24: #{transformer_layer_forward.7} parent=19 // pred_fallthru
          _
        // Predicated region
        $region25: #{transformer_layer_forward.7} parent=19 // pred_check
          %p178 = pneg %p96
        $region26: #{transformer_layer_forward.7} parent=19 // pred_check_branch
          %180 = sbr.rel (%p178) target = $region28
        $region27: #{transformer_layer_forward.7} parent=19 // pred_region
          %p181 = scmp.lt.s32.totalorder %s20, 2
          %s182 = scalar_select %p181, %s20, 2
          %s183 = scalar_lea.vmem %s2, %s182
        $region28: #{transformer_layer_forward.7} parent=19 // pred_fallthru
          _
      $region20: #{transformer_layer_forward.7} parent=5 // pred_fallthru
        _
      %p184 = scmp.le.s32.totalorder 1, %s12
      %p185 = scmp.lt.s32.totalorder %s12, 4
      %p186 = pnand %p184, %p185
      %p187 = pneg %p186
      // Predicated region
      $region29: #{transformer_layer_forward.7} parent=5 // pred_check
        _
      $region30: #{transformer_layer_forward.7} parent=5 // pred_check_branch
        %189 = sbr.rel (%p186) target = $region32
      $region31: #{transformer_layer_forward.7} parent=5 // pred_region
        %s190 = ssub.s32 %s12, 1
        %s191 = sand.u32 %s63, 1
        %s192 = scalar_lea.sflag [#allocation3], %s191
        %s193 = sand.u32 %s63, 1
        %s194 = smul.addr %s193, 64
        %s195 = scalar_lea.vmem [#allocation2], %s194
        // Predicated region
        $region33: #{transformer_layer_forward.7} parent=31 // pred_check
          %p196 = pneg %p76
        $region34: #{transformer_layer_forward.7} parent=31 // pred_check_branch
          %198 = sbr.rel (%p196) target = $region36
        $region35: #{transformer_layer_forward.7} parent=31 // pred_region
          %199 = dma.done %s192, 1024
        $region36: #{transformer_layer_forward.7} parent=31 // pred_fallthru
          _
        %s200 = smul.u32 2, %s21
        %p201 = scmp.lt.s32.totalorder %s200, 1
        %s202 = scalar_select %p201, %s200, 1
        %s203 = smul.addr %s202, 4
        %s204 = scalar_lea.vmem %s0, %s203
        %p205 = pneg %p50
        %p206 = pneg %p47
        %s207 = sand.u32 %s63, 1
        %s208 = scalar_lea.sflag [#allocation3], %s207
        %s209 = sand.u32 %s63, 1
        %s210 = smul.addr %s209, 64
        %s211 = scalar_lea.vmem [#allocation2], %s210
        %p212 = pneg %p76
        %p213 = pneg %p73
        %p214 = scmp.lt.s32.totalorder %s22, 2
        %s215 = scalar_select %p214, %s22, 2
        %s216 = scalar_lea.vmem %s2, %s215
        %p217 = pneg %p102
        %p218 = pneg %p99
        %p219 = pneg %p130
        %p220 = pneg %p127
        %s221 = sand.u32 %s117, 1
        %s222 = sand.u32 %s117, 1
        %s223 = smul.addr %s222, 8
        %s224 = scalar_lea.vmem [#allocation4], %s223
        %s225 = smul.u32 2, %s21
        %p226 = scmp.lt.s32.totalorder %s225, 1
        %s227 = scalar_select %p226, %s225, 1
        %s228 = smul.addr %s227, 4
        %s229 = scalar_lea.vmem %s0, %s228
        %s230 = smul.u32 2, %s21
        %p231 = scmp.lt.s32.totalorder %s22, 2
        %s232 = scalar_select %p231, %s22, 2
        %s233 = scalar_lea.vmem %s2, %s232
        %s234 = smul.u32 2, %s21
        %v236 = vld [vmem:[%s229] sm:$0xf]
        %v237 = vld [vmem:[%s229 + $0x4] sm:$0xf]
        %v238 = vld [vmem:[%s195] sm:$0xf]
        %v239 = vld [vmem:[%s195 + $0x4] sm:$0xf]
        %v240 = vld [vmem:[%s195 + $0x8] sm:$0xf]
        %v241 = vld [vmem:[%s195 + $0xc] sm:$0xf]
        %v242 = vld [vmem:[%s195 + $0x10] sm:$0xf]
        %v243 = vld [vmem:[%s195 + $0x14] sm:$0xf]
        %v244 = vld [vmem:[%s195 + $0x18] sm:$0xf]
        %v245 = vld [vmem:[%s195 + $0x1c] sm:$0xf]
        %v246 = vld [vmem:[%s195 + $0x20] sm:$0xf]
        %v247 = vld [vmem:[%s195 + $0x24] sm:$0xf]
        %v248 = vld [vmem:[%s195 + $0x28] sm:$0xf]
        %v249 = vld [vmem:[%s195 + $0x2c] sm:$0xf]
        %v250 = vld [vmem:[%s195 + $0x30] sm:$0xf]
        %v251 = vld [vmem:[%s195 + $0x34] sm:$0xf]
        %v252 = vld [vmem:[%s195 + $0x38] sm:$0xf]
        %v253 = vld [vmem:[%s195 + $0x3c] sm:$0xf]
        %v254 = vld [vmem:[%s233] sm:$0x1]
        %v256 = vlaneseq
        %v257 = vshrl.u32 %v256, 7
        %v258 = vsub.s32 0, %v257
        %v259 = vrot.slane %v254, %v258
        %v263 = vunpack.c.l.b16 %v236
        %v264 = vunpack.c.l.b16 %v237
        %v265 = vpack.c.b16 %v264, %v263
        %v283 = vunpack.c.l.b16 %v238
        %v284 = vunpack.c.l.b16 %v239
        %v285 = vunpack.c.l.b16 %v240
        %v286 = vunpack.c.l.b16 %v241
        %v287 = vunpack.c.l.b16 %v242
        %v288 = vunpack.c.l.b16 %v243
        %v289 = vunpack.c.l.b16 %v244
        %v290 = vunpack.c.l.b16 %v245
        %v291 = vunpack.c.l.b16 %v246
        %v292 = vunpack.c.l.b16 %v247
        %v293 = vunpack.c.l.b16 %v248
        %v294 = vunpack.c.l.b16 %v249
        %v295 = vunpack.c.l.b16 %v250
        %v296 = vunpack.c.l.b16 %v251
        %v297 = vunpack.c.l.b16 %v252
        %v298 = vunpack.c.l.b16 %v253
        %v299 = vpack.c.b16 %v284, %v283
        %v300 = vpack.c.b16 %v286, %v285
        %v301 = vpack.c.b16 %v288, %v287
        %v302 = vpack.c.b16 %v290, %v289
        %v303 = vpack.c.b16 %v292, %v291
        %v304 = vpack.c.b16 %v294, %v293
        %v305 = vpack.c.b16 %v296, %v295
        %v306 = vpack.c.b16 %v298, %v297
        %315 = vmatprep.subr.bf16.mxu0 0
        %316 = vmatpush1.bf16.msra.mxu0 %v299
        %317 = vmatprep.subr.bf16.mxu0 0
        %318 = vmatpush1.bf16.msra.mxu0 %v300
        %319 = vmatprep.subr.bf16.mxu0 0
        %320 = vmatpush1.bf16.msra.mxu0 %v301
        %321 = vmatprep.subr.bf16.mxu0 0
        %322 = vmatpush1.bf16.msra.mxu0 %v302
        %323 = vmatprep.subr.bf16.mxu0 0
        %324 = vmatpush1.bf16.msra.mxu0 %v303
        %325 = vmatprep.subr.bf16.mxu0 0
        %326 = vmatpush1.bf16.msra.mxu0 %v304
        %327 = vmatprep.subr.bf16.mxu0 0
        %328 = vmatpush1.bf16.msra.mxu0 %v305
        %329 = vmatprep.subr.bf16.mxu0 0
        %330 = vmatpush1.bf16.msra.mxu0 %v306
        %331 = vmatprep.subr.bf16.mxu0 0
        %332 = vmatpush1.bf16.msra.mxu0 0
        %333 = vmatprep.subr.bf16.mxu0 0
        %334 = vmatpush1.bf16.msra.mxu0 0
        %335 = vmatprep.subr.bf16.mxu0 0
        %336 = vmatpush1.bf16.msra.mxu0 0
        %337 = vmatprep.subr.bf16.mxu0 0
        %338 = vmatpush1.bf16.msra.mxu0 0
        %339 = vmatprep.subr.bf16.mxu0 0
        %340 = vmatpush1.bf16.msra.mxu0 0
        %341 = vmatprep.subr.bf16.mxu0 0
        %342 = vmatpush1.bf16.msra.mxu0 0
        %343 = vmatprep.subr.bf16.mxu0 0
        %344 = vmatpush1.bf16.msra.mxu0 0
        %345 = vmatprep.subr.bf16.mxu0 0
        %346 = vmatpush1.bf16.msra.mxu0 0
        %347 = vmatprep.mubr.bf16.mxu0 0
        %348 = vmatmul.mubr.bf16.gmra.mrb[0].mxu0 %v265
        %v349 = vpop.f32.mrb[0].mxu0
        %v350 = vadd.f32 %v259, %v349
        %v351 = vpop.f32.mrb[0].mxu0
        %v352 = vpop.f32.mrb[0].mxu0
        %v353 = vadd.f32 %v259, %v352
        %v354 = vpop.f32.mrb[0].mxu0
        %355 = vdwg.mxu0
        %v356 = vpack.c.bf16 %v353, %v350
        %v358 = vunpack.c.l.b16 %v356
        %v359 = vunpack.c.h.b16 %v356
        %v360 = vpack.c.b16 %v358, %v358
        %v361 = vpack.c.b16 %v359, %v359
        %364 = vst [vmem:[%s224] sm:$0xf] %v360
        %365 = vst [vmem:[%s224 + $0x4] sm:$0xf] %v361
        %s366 = sand.u32 %s117, 1
        %s367 = sand.u32 %s117, 1
        %s368 = smul.addr %s367, 8
        %s369 = scalar_lea.vmem [#allocation4], %s368
        // Predicated region
        $region37: #{transformer_layer_forward.7} parent=31 // pred_check
          %p370 = pneg %p127
        $region38: #{transformer_layer_forward.7} parent=31 // pred_check_branch
          %372 = sbr.rel (%p370) target = $region40
        $region39: #{transformer_layer_forward.7} parent=31 // pred_region
          %s373 = smul.u32 2, %s21
          %s374 = smul.addr %s373, 3
          %s375 = sadd.s32 %s22, %s374
          %s376 = smul.addr %s375, 4
          %s377 = scalar_lea.vmem %s3, %s376
          // Predicated region
          $region41: #{transformer_layer_forward.7} parent=39 // pred_check
            _
          $region42: #{transformer_layer_forward.7} parent=39 // pred_check_branch
            %379 = sbr.rel (0) target = $region44
          $region43: #{transformer_layer_forward.7} parent=39 // pred_region
            // Predicated region
            $region45: #{transformer_layer_forward.7} parent=43 // pred_check
              _
            $region46: #{transformer_layer_forward.7} parent=43 // pred_check_branch
              %381 = sbr.rel target = $region48
            $region47: #{transformer_layer_forward.7} parent=43 // pred_region
              // Predicated region
              $region60: #{transformer_layer_forward.7} parent=47 // pred_check
                _
              $region61: #{transformer_layer_forward.7} parent=47 // pred_check_branch
                %398 = sbr.rel (0) target = $region63
              $region62: #{transformer_layer_forward.7} parent=47 // pred_region
                loop: start=0, step=1, limit=1
                $region64: #{transformer_layer_forward.7} parent=62 // loop_pre_header
                  _
                $region65: #{transformer_layer_forward.7} parent=62 // loop_header
                  %s400 = sphi 0, %s404
                  %p401 = scmp.ge.s32.totalorder %s400, 1
                  %s405 = sphi %s369, %s369
                  %s406 = sphi %s377, %s377
                $region66: #{transformer_layer_forward.7} parent=62 // loop_header_branch
                  %403 = sbr.rel (%p401) target = $region70
                $region67: #{transformer_layer_forward.7} parent=62 // loop_body
                  _
                $region68: #{transformer_layer_forward.7} parent=62 // loop_footer
                  %s404 = sadd.s32 1, %s400
                $region69: #{transformer_layer_forward.7} parent=62 // loop_footer_branch
                  %399 = sbr.rel target = $region65
                $region70: #{transformer_layer_forward.7} parent=62 // loop_exit
                  _
                loop: start=0, step=1, limit=1
                $region71: #{transformer_layer_forward.7} parent=62 // loop_pre_header
                  _
                $region72: #{transformer_layer_forward.7} parent=62 // loop_header
                  %s409 = sphi 0, %s413
                  %p410 = scmp.ge.s32.totalorder %s409, 1
                  %s414 = sphi %s369, %s369
                  %s415 = sphi %s377, %s377
                $region73: #{transformer_layer_forward.7} parent=62 // loop_header_branch
                  %412 = sbr.rel (%p410) target = $region77
                $region74: #{transformer_layer_forward.7} parent=62 // loop_body
                  %v416 = vld [vmem:[%s414] sm:$0xf]
                  %417 = vst [vmem:[%s415] sm:$0xf] %v416
                  %v418 = vld [vmem:[%s414 + $0x4] sm:$0xf]
                  %419 = vst [vmem:[%s415 + $0xc] sm:$0xf] %v418
                $region75: #{transformer_layer_forward.7} parent=62 // loop_footer
                  %s413 = sadd.s32 1, %s409
                $region76: #{transformer_layer_forward.7} parent=62 // loop_footer_branch
                  %408 = sbr.rel target = $region72
                $region77: #{transformer_layer_forward.7} parent=62 // loop_exit
                  _
              $region63: #{transformer_layer_forward.7} parent=47 // pred_fallthru
                _
            $region48: #{transformer_layer_forward.7} parent=43 // pred_fallthru
              _
            // Predicated region
            $region49: #{transformer_layer_forward.7} parent=43 // pred_check
              _
            $region50: #{transformer_layer_forward.7} parent=43 // pred_check_branch
              %383 = sbr.rel (0) target = $region52
            $region51: #{transformer_layer_forward.7} parent=43 // pred_region
              loop: start=0, step=1, limit=1
              $region53: #{transformer_layer_forward.7} parent=51 // loop_pre_header
                _
              $region54: #{transformer_layer_forward.7} parent=51 // loop_header
                %s386 = sphi 0, %s390
                %p387 = scmp.ge.s32.totalorder %s386, 1
                %s391 = sphi %s369, %s369
                %s392 = sphi %s377, %s377
              $region55: #{transformer_layer_forward.7} parent=51 // loop_header_branch
                %389 = sbr.rel (%p387) target = $region59
              $region56: #{transformer_layer_forward.7} parent=51 // loop_body
                %v393 = vld [vmem:[%s391] sm:$0xf]
                %394 = vst [vmem:[%s392] sm:$0xf] %v393
                %v395 = vld [vmem:[%s391 + $0x4] sm:$0xf]
                %396 = vst [vmem:[%s392 + $0xc] sm:$0xf] %v395
              $region57: #{transformer_layer_forward.7} parent=51 // loop_footer
                %s390 = sadd.s32 1, %s386
              $region58: #{transformer_layer_forward.7} parent=51 // loop_footer_branch
                %385 = sbr.rel target = $region54
              $region59: #{transformer_layer_forward.7} parent=51 // loop_exit
                _
            $region52: #{transformer_layer_forward.7} parent=43 // pred_fallthru
              _
          $region44: #{transformer_layer_forward.7} parent=39 // pred_fallthru
            _
          %420 = vnop
        $region40: #{transformer_layer_forward.7} parent=31 // pred_fallthru
          _
      $region32: #{transformer_layer_forward.7} parent=5 // pred_fallthru
        _
      %p421 = scmp.le.s32.totalorder 2, %s12
      // Predicated region
      $region78: #{transformer_layer_forward.7} parent=5 // pred_check
        %p422 = pneg %p421
      $region79: #{transformer_layer_forward.7} parent=5 // pred_check_branch
        %424 = sbr.rel (%p422) target = $region81
      $region80: #{transformer_layer_forward.7} parent=5 // pred_region
        %s425 = ssub.s32 %s12, 2
        // Predicated region
        $region82: #{transformer_layer_forward.7} parent=80 // pred_check
          %p426 = pneg %p133
        $region83: #{transformer_layer_forward.7} parent=80 // pred_check_branch
          %428 = sbr.rel (%p426) target = $region85
        $region84: #{transformer_layer_forward.7} parent=80 // pred_region
          %s429 = sand.u32 %s118, 1
          %s430 = sand.u32 %s118, 1
          %s431 = smul.addr %s430, 8
          %s432 = scalar_lea.vmem [#allocation4], %s431
        $region85: #{transformer_layer_forward.7} parent=80 // pred_fallthru
          _
      $region81: #{transformer_layer_forward.7} parent=5 // pred_fallthru
        _
    $region6: #{transformer_layer_forward.7} parent=1 // loop_footer
      %s16 = sadd.s32 1, %s12
    $region7: #{transformer_layer_forward.7} parent=1 // loop_footer_branch
      %11 = sbr.rel target = $region3
    $region8: #{transformer_layer_forward.7} parent=1 // loop_exit
      _
    %433 = vsyncpa [#allocation3], 1
    %s434 = scalar_lea.sflag [#allocation3], 1
    %435 = vsyncpa %s434, 1

// kernel: transformer_layer_forward.10
$region0: #{transformer_layer_forward.10}
  #allocation0 [shape = 'u32[]', space=smem, size = 0x4, offset = 0x4, fixed_abs, tag = 'smem constant byte address 0x4 - core index']
  #allocation1 [shape = 'u32[144,128]{1,0:T(1,128)}', space=vmem, size = 0x12000, scoped, tag = 'internal scratch']
  %s0 = inlined_call_operand.vmem [shape: bf16[16,128], index: 0, kind: input, shape index: {}]
  %s1 = inlined_call_operand.vmem [shape: f32[1,128], index: 1, kind: input, shape index: {}]
  %s2 = inlined_call_operand.vmem [shape: f32[1,128], index: 2, kind: input, shape index: {}]
  %s3 = inlined_call_operand.vmem [shape: bf16[16,128], index: 3, kind: output, shape index: {}]
  %s4 = sld [smem:[#allocation0]]
  $region45: #{transformer_layer_forward.10} parent=0
    _
  %s6 = ssub.s32 1, %s4
  %s7 = scalar_select 0, %s6, %s4
  loop: start=0, step=1, limit=4
  $region2: #{transformer_layer_forward.10} parent=0 // loop_pre_header
    _
  $region3: #{transformer_layer_forward.10} parent=0 // loop_header
    %s9 = sphi 0, %s13
    %p10 = scmp.ge.s32.totalorder %s9, 4
    %s19 = sphi 0, %s21
    %s22 = sphi 0, %s19
    %s23 = sphi 0, %s22
    %s39 = sphi 0, %s23
    %s43 = sphi 0, %s43
    %s45 = sphi 0, %s43
    %s46 = sphi 0, %s45
    %s60 = sphi 0, %s46
    %s64 = sphi 0, %s64
    %s66 = sphi 0, %s64
    %s67 = sphi 0, %s66
    %s81 = sphi 0, %s67
    %s87 = sphi 0, %s89
    %s90 = sphi 0, %s87
    %s91 = sphi 0, %s90
    %s107 = sphi 0, %s91
  $region4: #{transformer_layer_forward.10} parent=0 // loop_header_branch
    %12 = sbr.rel (%p10) target = $region8
  $region5: #{transformer_layer_forward.10} parent=0 // loop_body
    %s14 = ssub.s32 %s9, 1
    %s15 = ssub.s32 %s9, 2
    %s16 = sadd.s32 %s9, 1
    %s17 = ssub.s32 %s9, %s16
    %p18 = scmp.eq.s32.totalorder %s17, 0
    %s20 = sadd.s32 %s19, 1
    %s21 = scalar_select %p18, %s19, %s20
    %p24 = pneg %p18
    %p25 = scmp.eq.s32.totalorder %s9, 1
    %p26 = por %p24, %p25
    %p27 = scmp.ne.s32.totalorder %s19, %s22
    %p28 = scmp.eq.s32.totalorder %s9, 0
    %p29 = por %p27, %p28
    %p30 = scmp.ne.s32.totalorder %s19, %s22
    %p31 = scmp.eq.s32.totalorder %s14, 1
    %p32 = por %p30, %p31
    %p33 = scmp.ne.s32.totalorder %s22, %s23
    %p34 = scmp.eq.s32.totalorder %s14, 0
    %p35 = por %p33, %p34
    %p36 = scmp.ne.s32.totalorder %s22, %s23
    %p37 = scmp.eq.s32.totalorder %s15, 1
    %p38 = por %p36, %p37
    %p40 = scmp.ne.s32.totalorder %s23, %s39
    %p41 = scmp.eq.s32.totalorder %s15, 0
    %p42 = por %p40, %p41
    %s44 = sadd.s32 %s43, 1
    %p47 = scmp.eq.s32.totalorder %s9, 1
    %p48 = scmp.ne.s32.totalorder %s43, %s45
    %p49 = scmp.eq.s32.totalorder %s9, 0
    %p50 = por %p48, %p49
    %p51 = scmp.ne.s32.totalorder %s43, %s45
    %p52 = scmp.eq.s32.totalorder %s14, 1
    %p53 = por %p51, %p52
    %p54 = scmp.ne.s32.totalorder %s45, %s46
    %p55 = scmp.eq.s32.totalorder %s14, 0
    %p56 = por %p54, %p55
    %p57 = scmp.ne.s32.totalorder %s45, %s46
    %p58 = scmp.eq.s32.totalorder %s15, 1
    %p59 = por %p57, %p58
    %p61 = scmp.ne.s32.totalorder %s46, %s60
    %p62 = scmp.eq.s32.totalorder %s15, 0
    %p63 = por %p61, %p62
    %s65 = sadd.s32 %s64, 1
    %p68 = scmp.eq.s32.totalorder %s9, 1
    %p69 = scmp.ne.s32.totalorder %s64, %s66
    %p70 = scmp.eq.s32.totalorder %s9, 0
    %p71 = por %p69, %p70
    %p72 = scmp.ne.s32.totalorder %s64, %s66
    %p73 = scmp.eq.s32.totalorder %s14, 1
    %p74 = por %p72, %p73
    %p75 = scmp.ne.s32.totalorder %s66, %s67
    %p76 = scmp.eq.s32.totalorder %s14, 0
    %p77 = por %p75, %p76
    %p78 = scmp.ne.s32.totalorder %s66, %s67
    %p79 = scmp.eq.s32.totalorder %s15, 1
    %p80 = por %p78, %p79
    %p82 = scmp.ne.s32.totalorder %s67, %s81
    %p83 = scmp.eq.s32.totalorder %s15, 0
    %p84 = por %p82, %p83
    %s85 = ssub.s32 %s9, %s16
    %p86 = scmp.eq.s32.totalorder %s85, 0
    %s88 = sadd.s32 %s87, 1
    %s89 = scalar_select %p86, %s87, %s88
    %p92 = pneg %p86
    %p93 = scmp.eq.s32.totalorder %s9, 1
    %p94 = por %p92, %p93
    %p95 = scmp.ne.s32.totalorder %s87, %s90
    %p96 = scmp.eq.s32.totalorder %s9, 0
    %p97 = por %p95, %p96
    %p98 = scmp.ne.s32.totalorder %s87, %s90
    %p99 = scmp.eq.s32.totalorder %s14, 1
    %p100 = por %p98, %p99
    %p101 = scmp.ne.s32.totalorder %s90, %s91
    %p102 = scmp.eq.s32.totalorder %s14, 0
    %p103 = por %p101, %p102
    %p104 = scmp.ne.s32.totalorder %s90, %s91
    %p105 = scmp.eq.s32.totalorder %s15, 1
    %p106 = por %p104, %p105
    %p108 = scmp.ne.s32.totalorder %s91, %s107
    %p109 = scmp.eq.s32.totalorder %s15, 0
    %p110 = por %p108, %p109
    %p111 = scmp.le.s32.totalorder 1, %s9
    %p112 = scmp.lt.s32.totalorder %s9, 3
    %p113 = pnand %p111, %p112
    %p114 = pneg %p113
    // Predicated region
    $region9: #{transformer_layer_forward.10} parent=5 // pred_check
      _
    $region10: #{transformer_layer_forward.10} parent=5 // pred_check_branch
      %116 = sbr.rel (%p113) target = $region12
    $region11: #{transformer_layer_forward.10} parent=5 // pred_region
      %s117 = ssub.s32 %s9, 1
      // Predicated region
      $region13: #{transformer_layer_forward.10} parent=11 // pred_check
        %p118 = pneg %p56
      $region14: #{transformer_layer_forward.10} parent=11 // pred_check_branch
        %120 = sbr.rel (%p118) target = $region16
      $region15: #{transformer_layer_forward.10} parent=11 // pred_region
        _
      $region16: #{transformer_layer_forward.10} parent=11 // pred_fallthru
        _
      // Predicated region
      $region17: #{transformer_layer_forward.10} parent=11 // pred_check
        %p121 = pneg %p77
      $region18: #{transformer_layer_forward.10} parent=11 // pred_check_branch
        %123 = sbr.rel (%p121) target = $region20
      $region19: #{transformer_layer_forward.10} parent=11 // pred_region
        _
      $region20: #{transformer_layer_forward.10} parent=11 // pred_fallthru
        _
    $region12: #{transformer_layer_forward.10} parent=5 // pred_fallthru
      _
    %p124 = scmp.lt.s32.totalorder %s9, 2
    // Predicated region
    $region21: #{transformer_layer_forward.10} parent=5 // pred_check
      %p125 = pneg %p124
    $region22: #{transformer_layer_forward.10} parent=5 // pred_check_branch
      %127 = sbr.rel (%p125) target = $region24
    $region23: #{transformer_layer_forward.10} parent=5 // pred_region
      // Predicated region
      $region25: #{transformer_layer_forward.10} parent=23 // pred_check
        %p128 = pneg %p29
      $region26: #{transformer_layer_forward.10} parent=23 // pred_check_branch
        %130 = sbr.rel (%p128) target = $region28
      $region27: #{transformer_layer_forward.10} parent=23 // pred_region
        %p131 = scmp.lt.s32.totalorder %s9, 1
        %s132 = scalar_select %p131, %s9, 1
        %s133 = smul.addr %s132, 4
        %s134 = scalar_lea.vmem %s0, %s133
      $region28: #{transformer_layer_forward.10} parent=23 // pred_fallthru
        _
    $region24: #{transformer_layer_forward.10} parent=5 // pred_fallthru
      _
    %p135 = scmp.le.s32.totalorder 1, %s9
    %p136 = scmp.lt.s32.totalorder %s9, 3
    %p137 = pnand %p135, %p136
    %p138 = pneg %p137
    // Predicated region
    $region29: #{transformer_layer_forward.10} parent=5 // pred_check
      _
    $region30: #{transformer_layer_forward.10} parent=5 // pred_check_branch
      %140 = sbr.rel (%p137) target = $region32
    $region31: #{transformer_layer_forward.10} parent=5 // pred_region
      %s141 = ssub.s32 %s9, 1
      %p142 = scmp.lt.s32.totalorder %s14, 1
      %s143 = scalar_select %p142, %s14, 1
      %s144 = smul.addr %s143, 4
      %s145 = scalar_lea.vmem %s0, %s144
      %p146 = pneg %p35
      %p147 = pneg %p32
      %p148 = pneg %p56
      %p149 = pneg %p53
      %p150 = pneg %p77
      %p151 = pneg %p74
      %p152 = pneg %p103
      %p153 = pneg %p100
      %p154 = scmp.lt.s32.totalorder %s14, 1
      %s155 = scalar_select %p154, %s14, 1
      %s156 = smul.addr %s155, 4
      %s157 = scalar_lea.vmem %s3, %s156
      %p158 = scmp.lt.s32.totalorder %s14, 1
      %s159 = scalar_select %p158, %s14, 1
      %s160 = smul.addr %s159, 4
      %s161 = scalar_lea.vmem %s0, %s160
      %p162 = scmp.lt.s32.totalorder %s14, 1
      %s163 = scalar_select %p162, %s14, 1
      %s164 = smul.addr %s163, 4
      %s165 = scalar_lea.vmem %s3, %s164
      %v166 = vld [vmem:[%s161] sm:$0xf]
      %v167 = vunpack.c.l.bf16 %v166
      %v168 = vlaneseq
      %v169 = vand.u32 %v168, 127
      %vm170 = vcmp.lt.s32.totalorder %v169, 32
      %v171 = vsel %vm170, %v167, 0.0
      %172 = vadd.xlane.f32.xlu0 %v171
      %v173 = vpop.xlane.xlu0 %172
      %v174 = vmul.f32 %v173, 0.03125
      %v175 = vsub.f32 %v167, %v174
      %v176 = vsel %vm170, %v175, 0.0
      %v177 = vmul.f32 %v176, %v176
      %178 = vadd.xlane.f32.xlu0 %v177
      %v179 = vpop.xlane.xlu0 %178
      %v180 = vmul.f32 %v179, 0.03125
      %v181 = vadd.f32 %v180, 1e-05
      %v182 = vrsqrt.pop %v181
      %v183 = vmul.f32 %v175, %v182
      %v184 = vld [vmem:[%s1] sm:$0x1]
      %v186 = vlaneseq
      %v187 = vshrl.u32 %v186, 7
      %v188 = vsub.s32 0, %v187
      %v189 = vrot.slane %v184, %v188
      %v191 = vmul.f32 %v183, %v189
      %v192 = vld [vmem:[%s2] sm:$0x1]
      %v194 = vlaneseq
      %v195 = vshrl.u32 %v194, 7
      %v196 = vsub.s32 0, %v195
      %v197 = vrot.slane %v192, %v196
      %v199 = vadd.f32 %v191, %v197
      %v200 = vpack.c.bf16 %v199, %v199
      %201 = vst [vmem:[%s165] sm:$0xf] %v200
      %p202 = scmp.lt.s32.totalorder %s14, 1
      %s203 = scalar_select %p202, %s14, 1
      %s204 = smul.addr %s203, 4
      %s205 = scalar_lea.vmem %s3, %s204
      // Predicated region
      $region33: #{transformer_layer_forward.10} parent=31 // pred_check
        %p206 = pneg %p100
      $region34: #{transformer_layer_forward.10} parent=31 // pred_check_branch
        %208 = sbr.rel (%p206) target = $region36
      $region35: #{transformer_layer_forward.10} parent=31 // pred_region
        _
      $region36: #{transformer_layer_forward.10} parent=31 // pred_fallthru
        _
    $region32: #{transformer_layer_forward.10} parent=5 // pred_fallthru
      _
    %p209 = scmp.le.s32.totalorder 2, %s9
    // Predicated region
    $region37: #{transformer_layer_forward.10} parent=5 // pred_check
      %p210 = pneg %p209
    $region38: #{transformer_layer_forward.10} parent=5 // pred_check_branch
      %212 = sbr.rel (%p210) target = $region40
    $region39: #{transformer_layer_forward.10} parent=5 // pred_region
      %s213 = ssub.s32 %s9, 2
      // Predicated region
      $region41: #{transformer_layer_forward.10} parent=39 // pred_check
        %p214 = pneg %p106
      $region42: #{transformer_layer_forward.10} parent=39 // pred_check_branch
        %216 = sbr.rel (%p214) target = $region44
      $region43: #{transformer_layer_forward.10} parent=39 // pred_region
        %p217 = scmp.lt.s32.totalorder %s15, 1
        %s218 = scalar_select %p217, %s15, 1
        %s219 = smul.addr %s218, 4
        %s220 = scalar_lea.vmem %s3, %s219
      $region44: #{transformer_layer_forward.10} parent=39 // pred_fallthru
        _
    $region40: #{transformer_layer_forward.10} parent=5 // pred_fallthru
      _
  $region6: #{transformer_layer_forward.10} parent=0 // loop_footer
    %s13 = sadd.s32 1, %s9
  $region7: #{transformer_layer_forward.10} parent=0 // loop_footer_branch
    %8 = sbr.rel target = $region3
  $region8: #{transformer_layer_forward.10} parent=0 // loop_exit
    _

// kernel: transformer_layer_forward.8
$region0: #{transformer_layer_forward.8}
  #allocation0 [shape = 'u32[]', space=smem, size = 0x4, offset = 0x4, fixed_abs, tag = 'smem constant byte address 0x4 - core index']
  #allocation1 [shape = 'u32[144,128]{1,0:T(1,128)}', space=vmem, size = 0x12000, scoped, tag = 'internal scratch']
  %s0 = inlined_call_operand.vmem [shape: bf16[2,8,128], index: 0, kind: input, shape index: {}]
  %s1 = inlined_call_operand.vmem [shape: bf16[2,8,128], index: 1, kind: input, shape index: {}]
  %s2 = inlined_call_operand.vmem [shape: bf16[2,8,128], index: 2, kind: input, shape index: {}]
  %s3 = inlined_call_operand.vmem [shape: bf16[2,8,128], index: 3, kind: output, shape index: {}]
  %s4 = sld [smem:[#allocation0]]
  $region45: #{transformer_layer_forward.8} parent=0
    _
  %s6 = ssub.s32 1, %s4
  %s7 = scalar_select 0, %s6, %s4
  loop: start=0, step=1, limit=4
  $region2: #{transformer_layer_forward.8} parent=0 // loop_pre_header
    _
  $region3: #{transformer_layer_forward.8} parent=0 // loop_header
    %s9 = sphi 0, %s13
    %p10 = scmp.ge.s32.totalorder %s9, 4
    %s19 = sphi 0, %s21
    %s22 = sphi 0, %s19
    %s23 = sphi 0, %s22
    %s39 = sphi 0, %s23
    %s45 = sphi 0, %s47
    %s48 = sphi 0, %s45
    %s49 = sphi 0, %s48
    %s65 = sphi 0, %s49
    %s71 = sphi 0, %s73
    %s74 = sphi 0, %s71
    %s75 = sphi 0, %s74
    %s91 = sphi 0, %s75
    %s97 = sphi 0, %s99
    %s100 = sphi 0, %s97
    %s101 = sphi 0, %s100
    %s117 = sphi 0, %s101
  $region4: #{transformer_layer_forward.8} parent=0 // loop_header_branch
    %12 = sbr.rel (%p10) target = $region8
  $region5: #{transformer_layer_forward.8} parent=0 // loop_body
    %s14 = ssub.s32 %s9, 1
    %s15 = ssub.s32 %s9, 2
    %s16 = sadd.s32 %s9, 1
    %s17 = ssub.s32 %s9, %s16
    %p18 = scmp.eq.s32.totalorder %s17, 0
    %s20 = sadd.s32 %s19, 1
    %s21 = scalar_select %p18, %s19, %s20
    %p24 = pneg %p18
    %p25 = scmp.eq.s32.totalorder %s9, 1
    %p26 = por %p24, %p25
    %p27 = scmp.ne.s32.totalorder %s19, %s22
    %p28 = scmp.eq.s32.totalorder %s9, 0
    %p29 = por %p27, %p28
    %p30 = scmp.ne.s32.totalorder %s19, %s22
    %p31 = scmp.eq.s32.totalorder %s14, 1
    %p32 = por %p30, %p31
    %p33 = scmp.ne.s32.totalorder %s22, %s23
    %p34 = scmp.eq.s32.totalorder %s14, 0
    %p35 = por %p33, %p34
    %p36 = scmp.ne.s32.totalorder %s22, %s23
    %p37 = scmp.eq.s32.totalorder %s15, 1
    %p38 = por %p36, %p37
    %p40 = scmp.ne.s32.totalorder %s23, %s39
    %p41 = scmp.eq.s32.totalorder %s15, 0
    %p42 = por %p40, %p41
    %s43 = ssub.s32 %s9, %s16
    %p44 = scmp.eq.s32.totalorder %s43, 0
    %s46 = sadd.s32 %s45, 1
    %s47 = scalar_select %p44, %s45, %s46
    %p50 = pneg %p44
    %p51 = scmp.eq.s32.totalorder %s9, 1
    %p52 = por %p50, %p51
    %p53 = scmp.ne.s32.totalorder %s45, %s48
    %p54 = scmp.eq.s32.totalorder %s9, 0
    %p55 = por %p53, %p54
    %p56 = scmp.ne.s32.totalorder %s45, %s48
    %p57 = scmp.eq.s32.totalorder %s14, 1
    %p58 = por %p56, %p57
    %p59 = scmp.ne.s32.totalorder %s48, %s49
    %p60 = scmp.eq.s32.totalorder %s14, 0
    %p61 = por %p59, %p60
    %p62 = scmp.ne.s32.totalorder %s48, %s49
    %p63 = scmp.eq.s32.totalorder %s15, 1
    %p64 = por %p62, %p63
    %p66 = scmp.ne.s32.totalorder %s49, %s65
    %p67 = scmp.eq.s32.totalorder %s15, 0
    %p68 = por %p66, %p67
    %s69 = ssub.s32 %s9, %s16
    %p70 = scmp.eq.s32.totalorder %s69, 0
    %s72 = sadd.s32 %s71, 1
    %s73 = scalar_select %p70, %s71, %s72
    %p76 = pneg %p70
    %p77 = scmp.eq.s32.totalorder %s9, 1
    %p78 = por %p76, %p77
    %p79 = scmp.ne.s32.totalorder %s71, %s74
    %p80 = scmp.eq.s32.totalorder %s9, 0
    %p81 = por %p79, %p80
    %p82 = scmp.ne.s32.totalorder %s71, %s74
    %p83 = scmp.eq.s32.totalorder %s14, 1
    %p84 = por %p82, %p83
    %p85 = scmp.ne.s32.totalorder %s74, %s75
    %p86 = scmp.eq.s32.totalorder %s14, 0
    %p87 = por %p85, %p86
    %p88 = scmp.ne.s32.totalorder %s74, %s75
    %p89 = scmp.eq.s32.totalorder %s15, 1
    %p90 = por %p88, %p89
    %p92 = scmp.ne.s32.totalorder %s75, %s91
    %p93 = scmp.eq.s32.totalorder %s15, 0
    %p94 = por %p92, %p93
    %s95 = ssub.s32 %s9, %s16
    %p96 = scmp.eq.s32.totalorder %s95, 0
    %s98 = sadd.s32 %s97, 1
    %s99 = scalar_select %p96, %s97, %s98
    %p102 = pneg %p96
    %p103 = scmp.eq.s32.totalorder %s9, 1
    %p104 = por %p102, %p103
    %p105 = scmp.ne.s32.totalorder %s97, %s100
    %p106 = scmp.eq.s32.totalorder %s9, 0
    %p107 = por %p105, %p106
    %p108 = scmp.ne.s32.totalorder %s97, %s100
    %p109 = scmp.eq.s32.totalorder %s14, 1
    %p110 = por %p108, %p109
    %p111 = scmp.ne.s32.totalorder %s100, %s101
    %p112 = scmp.eq.s32.totalorder %s14, 0
    %p113 = por %p111, %p112
    %p114 = scmp.ne.s32.totalorder %s100, %s101
    %p115 = scmp.eq.s32.totalorder %s15, 1
    %p116 = por %p114, %p115
    %p118 = scmp.ne.s32.totalorder %s101, %s117
    %p119 = scmp.eq.s32.totalorder %s15, 0
    %p120 = por %p118, %p119
    %p121 = scmp.le.s32.totalorder 1, %s9
    %p122 = scmp.lt.s32.totalorder %s9, 3
    %p123 = pnand %p121, %p122
    %p124 = pneg %p123
    // Predicated region
    $region9: #{transformer_layer_forward.8} parent=5 // pred_check
      _
    $region10: #{transformer_layer_forward.8} parent=5 // pred_check_branch
      %126 = sbr.rel (%p123) target = $region12
    $region11: #{transformer_layer_forward.8} parent=5 // pred_region
      %s127 = ssub.s32 %s9, 1
    $region12: #{transformer_layer_forward.8} parent=5 // pred_fallthru
      _
    %p128 = scmp.lt.s32.totalorder %s9, 2
    // Predicated region
    $region13: #{transformer_layer_forward.8} parent=5 // pred_check
      %p129 = pneg %p128
    $region14: #{transformer_layer_forward.8} parent=5 // pred_check_branch
      %131 = sbr.rel (%p129) target = $region16
    $region15: #{transformer_layer_forward.8} parent=5 // pred_region
      // Predicated region
      $region17: #{transformer_layer_forward.8} parent=15 // pred_check
        %p132 = pneg %p29
      $region18: #{transformer_layer_forward.8} parent=15 // pred_check_branch
        %134 = sbr.rel (%p132) target = $region20
      $region19: #{transformer_layer_forward.8} parent=15 // pred_region
        %p135 = scmp.lt.s32.totalorder %s9, 1
        %s136 = scalar_select %p135, %s9, 1
        %s137 = smul.addr %s136, 4
        %s138 = scalar_lea.vmem %s0, %s137
      $region20: #{transformer_layer_forward.8} parent=15 // pred_fallthru
        _
      // Predicated region
      $region21: #{transformer_layer_forward.8} parent=15 // pred_check
        %p139 = pneg %p55
      $region22: #{transformer_layer_forward.8} parent=15 // pred_check_branch
        %141 = sbr.rel (%p139) target = $region24
      $region23: #{transformer_layer_forward.8} parent=15 // pred_region
        %p142 = scmp.lt.s32.totalorder %s9, 1
        %s143 = scalar_select %p142, %s9, 1
        %s144 = smul.addr %s143, 4
        %s145 = scalar_lea.vmem %s1, %s144
      $region24: #{transformer_layer_forward.8} parent=15 // pred_fallthru
        _
      // Predicated region
      $region25: #{transformer_layer_forward.8} parent=15 // pred_check
        %p146 = pneg %p81
      $region26: #{transformer_layer_forward.8} parent=15 // pred_check_branch
        %148 = sbr.rel (%p146) target = $region28
      $region27: #{transformer_layer_forward.8} parent=15 // pred_region
        %p149 = scmp.lt.s32.totalorder %s9, 1
        %s150 = scalar_select %p149, %s9, 1
        %s151 = smul.addr %s150, 4
        %s152 = scalar_lea.vmem %s2, %s151
      $region28: #{transformer_layer_forward.8} parent=15 // pred_fallthru
        _
    $region16: #{transformer_layer_forward.8} parent=5 // pred_fallthru
      _
    %p153 = scmp.le.s32.totalorder 1, %s9
    %p154 = scmp.lt.s32.totalorder %s9, 3
    %p155 = pnand %p153, %p154
    %p156 = pneg %p155
    // Predicated region
    $region29: #{transformer_layer_forward.8} parent=5 // pred_check
      _
    $region30: #{transformer_layer_forward.8} parent=5 // pred_check_branch
      %158 = sbr.rel (%p155) target = $region32
    $region31: #{transformer_layer_forward.8} parent=5 // pred_region
      %s159 = ssub.s32 %s9, 1
      %p160 = scmp.lt.s32.totalorder %s14, 1
      %s161 = scalar_select %p160, %s14, 1
      %s162 = smul.addr %s161, 4
      %s163 = scalar_lea.vmem %s0, %s162
      %p164 = pneg %p35
      %p165 = pneg %p32
      %p166 = scmp.lt.s32.totalorder %s14, 1
      %s167 = scalar_select %p166, %s14, 1
      %s168 = smul.addr %s167, 4
      %s169 = scalar_lea.vmem %s1, %s168
      %p170 = pneg %p61
      %p171 = pneg %p58
      %p172 = scmp.lt.s32.totalorder %s14, 1
      %s173 = scalar_select %p172, %s14, 1
      %s174 = smul.addr %s173, 4
      %s175 = scalar_lea.vmem %s2, %s174
      %p176 = pneg %p87
      %p177 = pneg %p84
      %p178 = pneg %p113
      %p179 = pneg %p110
      %p180 = scmp.lt.s32.totalorder %s14, 1
      %s181 = scalar_select %p180, %s14, 1
      %s182 = smul.addr %s181, 4
      %s183 = scalar_lea.vmem %s3, %s182
      %p184 = scmp.lt.s32.totalorder %s14, 1
      %s185 = scalar_select %p184, %s14, 1
      %s186 = smul.addr %s185, 4
      %s187 = scalar_lea.vmem %s0, %s186
      %p188 = scmp.lt.s32.totalorder %s14, 1
      %s189 = scalar_select %p188, %s14, 1
      %s190 = smul.addr %s189, 4
      %s191 = scalar_lea.vmem %s1, %s190
      %p192 = scmp.lt.s32.totalorder %s14, 1
      %s193 = scalar_select %p192, %s14, 1
      %s194 = smul.addr %s193, 4
      %s195 = scalar_lea.vmem %s2, %s194
      %p196 = scmp.lt.s32.totalorder %s14, 1
      %s197 = scalar_select %p196, %s14, 1
      %s198 = smul.addr %s197, 4
      %s199 = scalar_lea.vmem %s3, %s198
      %v201 = vld [vmem:[%s187] sm:$0xf]
      %v202 = vld [vmem:[%s191] sm:$0xf]
      %203 = vmatprep.subr.bf16.mxu0 0
      %204 = vmatpush1.bf16.xpose.msra.mxu0 %v202
      %205 = vmatprep.subr.bf16.mxu0 0
      %206 = vmatpush1.bf16.xpose.msra.mxu0 0
      %207 = vmatprep.subr.bf16.mxu0 0
      %208 = vmatpush1.bf16.xpose.msra.mxu0 0
      %209 = vmatprep.subr.bf16.mxu0 0
      %210 = vmatpush1.bf16.xpose.msra.mxu0 0
      %211 = vmatprep.subr.bf16.mxu0 0
      %212 = vmatpush1.bf16.xpose.msra.mxu0 0
      %213 = vmatprep.subr.bf16.mxu0 0
      %214 = vmatpush1.bf16.xpose.msra.mxu0 0
      %215 = vmatprep.subr.bf16.mxu0 0
      %216 = vmatpush1.bf16.xpose.msra.mxu0 0
      %217 = vmatprep.subr.bf16.mxu0 0
      %218 = vmatpush1.bf16.xpose.msra.mxu0 0
      %219 = vmatprep.subr.bf16.mxu0 0
      %220 = vmatpush1.bf16.xpose.msra.mxu0 0
      %221 = vmatprep.subr.bf16.mxu0 0
      %222 = vmatpush1.bf16.xpose.msra.mxu0 0
      %223 = vmatprep.subr.bf16.mxu0 0
      %224 = vmatpush1.bf16.xpose.msra.mxu0 0
      %225 = vmatprep.subr.bf16.mxu0 0
      %226 = vmatpush1.bf16.xpose.msra.mxu0 0
      %227 = vmatprep.subr.bf16.mxu0 0
      %228 = vmatpush1.bf16.xpose.msra.mxu0 0
      %229 = vmatprep.subr.bf16.mxu0 0
      %230 = vmatpush1.bf16.xpose.msra.mxu0 0
      %231 = vmatprep.subr.bf16.mxu0 0
      %232 = vmatpush1.bf16.xpose.msra.mxu0 0
      %233 = vmatprep.subr.bf16.mxu0 0
      %234 = vmatpush1.bf16.xpose.msra.mxu0 0
      %235 = vmatprep.mubr.bf16.mxu0 0
      %236 = vmatmul.mubr.bf16.gmra.mrb[0].mxu0 %v201
      %v237 = vpop.f32.mrb[0].mxu0
      %v238 = vadd.f32 0.0, %v237
      %v239 = vpop.f32.mrb[0].mxu0
      %v240 = vpop.f32.mrb[0].mxu0
      %v241 = vpop.f32.mrb[0].mxu0
      %242 = vdwg.mxu0
      %vm243 = vcmask 64512
      %v244 = vsel %vm243, %v238, -inf
      %245 = vmax.xlane.f32.xlu0 %v244
      %v246 = vpop.xlane.xlu0 %245
      %v247 = vsub.f32 %v238, %v246
      %v248 = vmul.f32 %v247, 1.442695
      %v249 = vpow.pop %v248
      %v250 = vsel %vm243, %v249, 0.0
      %251 = vadd.xlane.f32.xlu0 %v250
      %v252 = vpop.xlane.xlu0 %251
      %v253 = vpack.c.bf16 %v249, %v249
      %v254 = vld [vmem:[%s195] sm:$0xf]
      %v256 = vsel %vm243, %v253, 0
      %vm258 = vcmask 1043456
      %v260 = vsel %vm258, %v254, 0
      %262 = vmatprep.subr.bf16.mxu0 0
      %263 = vmatpush1.bf16.msra.mxu0 %v260
      %264 = vmatprep.subr.bf16.mxu0 0
      %265 = vmatpush1.bf16.msra.mxu0 0
      %266 = vmatprep.subr.bf16.mxu0 0
      %267 = vmatpush1.bf16.msra.mxu0 0
      %268 = vmatprep.subr.bf16.mxu0 0
      %269 = vmatpush1.bf16.msra.mxu0 0
      %270 = vmatprep.subr.bf16.mxu0 0
      %271 = vmatpush1.bf16.msra.mxu0 0
      %272 = vmatprep.subr.bf16.mxu0 0
      %273 = vmatpush1.bf16.msra.mxu0 0
      %274 = vmatprep.subr.bf16.mxu0 0
      %275 = vmatpush1.bf16.msra.mxu0 0
      %276 = vmatprep.subr.bf16.mxu0 0
      %277 = vmatpush1.bf16.msra.mxu0 0
      %278 = vmatprep.subr.bf16.mxu0 0
      %279 = vmatpush1.bf16.msra.mxu0 0
      %280 = vmatprep.subr.bf16.mxu0 0
      %281 = vmatpush1.bf16.msra.mxu0 0
      %282 = vmatprep.subr.bf16.mxu0 0
      %283 = vmatpush1.bf16.msra.mxu0 0
      %284 = vmatprep.subr.bf16.mxu0 0
      %285 = vmatpush1.bf16.msra.mxu0 0
      %286 = vmatprep.subr.bf16.mxu0 0
      %287 = vmatpush1.bf16.msra.mxu0 0
      %288 = vmatprep.subr.bf16.mxu0 0
      %289 = vmatpush1.bf16.msra.mxu0 0
      %290 = vmatprep.subr.bf16.mxu0 0
      %291 = vmatpush1.bf16.msra.mxu0 0
      %292 = vmatprep.subr.bf16.mxu0 0
      %293 = vmatpush1.bf16.msra.mxu0 0
      %294 = vmatprep.mubr.bf16.mxu0 0
      %295 = vmatmul.mubr.bf16.gmra.mrb[0].mxu0 %v256
      %v296 = vpop.f32.mrb[0].mxu0
      %v297 = vadd.f32 0.0, %v296
      %v298 = vpop.f32.mrb[0].mxu0
      %v299 = vpop.f32.mrb[0].mxu0
      %v300 = vpop.f32.mrb[0].mxu0
      %301 = vdwg.mxu0
      %v302 = vrcp.pop %v252
      %v303 = vmul.f32 %v297, %v302
      %v304 = vpack.c.bf16 %v303, %v303
      %305 = vst [vmem:[%s199] sm:$0xf] %v304
      %p306 = scmp.lt.s32.totalorder %s14, 1
      %s307 = scalar_select %p306, %s14, 1
      %s308 = smul.addr %s307, 4
      %s309 = scalar_lea.vmem %s3, %s308
      // Predicated region
      $region33: #{transformer_layer_forward.8} parent=31 // pred_check
        %p310 = pneg %p110
      $region34: #{transformer_layer_forward.8} parent=31 // pred_check_branch
        %312 = sbr.rel (%p310) target = $region36
      $region35: #{transformer_layer_forward.8} parent=31 // pred_region
        _
      $region36: #{transformer_layer_forward.8} parent=31 // pred_fallthru
        _
    $region32: #{transformer_layer_forward.8} parent=5 // pred_fallthru
      _
    %p313 = scmp.le.s32.totalorder 2, %s9
    // Predicated region
    $region37: #{transformer_layer_forward.8} parent=5 // pred_check
      %p314 = pneg %p313
    $region38: #{transformer_layer_forward.8} parent=5 // pred_check_branch
      %316 = sbr.rel (%p314) target = $region40
    $region39: #{transformer_layer_forward.8} parent=5 // pred_region
      %s317 = ssub.s32 %s9, 2
      // Predicated region
      $region41: #{transformer_layer_forward.8} parent=39 // pred_check
        %p318 = pneg %p116
      $region42: #{transformer_layer_forward.8} parent=39 // pred_check_branch
        %320 = sbr.rel (%p318) target = $region44
      $region43: #{transformer_layer_forward.8} parent=39 // pred_region
        %p321 = scmp.lt.s32.totalorder %s15, 1
        %s322 = scalar_select %p321, %s15, 1
        %s323 = smul.addr %s322, 4
        %s324 = scalar_lea.vmem %s3, %s323
      $region44: #{transformer_layer_forward.8} parent=39 // pred_fallthru
        _
    $region40: #{transformer_layer_forward.8} parent=5 // pred_fallthru
      _
  $region6: #{transformer_layer_forward.8} parent=0 // loop_footer
    %s13 = sadd.s32 1, %s9
  $region7: #{transformer_layer_forward.8} parent=0 // loop_footer_branch
    %8 = sbr.rel target = $region3
  $region8: #{transformer_layer_forward.8} parent=0 // loop_exit
    _

// kernel: transformer_layer_forward.9
$region0: #{transformer_layer_forward.9}
  #allocation0 [shape = 'u32[]', space=smem, size = 0x4, offset = 0x4, fixed_abs, tag = 'smem constant byte address 0x4 - core index']
  #allocation1 [shape = 'u32[144,128]{1,0:T(1,128)}', space=vmem, size = 0x12000, scoped, tag = 'internal scratch']
  %s0 = inlined_call_operand.vmem [shape: bf16[16,128], index: 0, kind: input, shape index: {}]
  %s1 = inlined_call_operand.vmem [shape: bf16[128,128], index: 1, kind: input, shape index: {}]
  %s2 = inlined_call_operand.vmem [shape: f32[1,128], index: 2, kind: input, shape index: {}]
  %s3 = inlined_call_operand.vmem [shape: bf16[16,128], index: 3, kind: input, shape index: {}]
  %s4 = inlined_call_operand.vmem [shape: bf16[16,128], index: 4, kind: output, shape index: {}]
  %s5 = sld [smem:[#allocation0]]
  $region49: #{transformer_layer_forward.9} parent=0
    _
  %s7 = ssub.s32 1, %s5
  %s8 = scalar_select 0, %s7, %s5
  loop: start=0, step=1, limit=4
  $region2: #{transformer_layer_forward.9} parent=0 // loop_pre_header
    _
  $region3: #{transformer_layer_forward.9} parent=0 // loop_header
    %s10 = sphi 0, %s14
    %p11 = scmp.ge.s32.totalorder %s10, 4
    %s17 = sphi 0, %s29
    %s18 = sphi 0, %s25
    %s19 = sphi 0, %s17
    %s20 = sphi 0, %s18
    %s21 = sphi 0, %s19
    %s22 = sphi 0, %s20
    %s32 = sphi 0, %s34
    %s35 = sphi 0, %s32
    %s36 = sphi 0, %s35
    %s52 = sphi 0, %s36
    %s58 = sphi 0, %s60
    %s61 = sphi 0, %s58
    %s62 = sphi 0, %s61
    %s78 = sphi 0, %s62
    %s84 = sphi 0, %s86
    %s87 = sphi 0, %s84
    %s88 = sphi 0, %s87
    %s104 = sphi 0, %s88
    %s112 = sphi 0, %s114
    %s115 = sphi 0, %s112
    %s116 = sphi 0, %s115
    %s132 = sphi 0, %s116
    %s140 = sphi 0, %s142
    %s143 = sphi 0, %s140
    %s144 = sphi 0, %s143
    %s160 = sphi 0, %s144
  $region4: #{transformer_layer_forward.9} parent=0 // loop_header_branch
    %13 = sbr.rel (%p11) target = $region8
  $region5: #{transformer_layer_forward.9} parent=0 // loop_body
    %s15 = ssub.s32 %s10, 1
    %s16 = ssub.s32 %s10, 2
    %s23 = sadd.s32 1, %s18
    %p24 = scmp.ge.s32.totalorder %s23, 1
    %s25 = scalar_select %p24, 0, %s23
    %s26 = sadd.s32 1, %s17
    %s27 = scalar_select %p24, %s26, %s17
    %p28 = scmp.ge.s32.totalorder %s27, 2
    %s29 = scalar_select %p28, 0, %s27
    %s30 = ssub.s32 %s17, %s29
    %p31 = scmp.eq.s32.totalorder %s30, 0
    %s33 = sadd.s32 %s32, 1
    %s34 = scalar_select %p31, %s32, %s33
    %p37 = pneg %p31
    %p38 = scmp.eq.s32.totalorder %s10, 1
    %p39 = por %p37, %p38
    %p40 = scmp.ne.s32.totalorder %s32, %s35
    %p41 = scmp.eq.s32.totalorder %s10, 0
    %p42 = por %p40, %p41
    %p43 = scmp.ne.s32.totalorder %s32, %s35
    %p44 = scmp.eq.s32.totalorder %s15, 1
    %p45 = por %p43, %p44
    %p46 = scmp.ne.s32.totalorder %s35, %s36
    %p47 = scmp.eq.s32.totalorder %s15, 0
    %p48 = por %p46, %p47
    %p49 = scmp.ne.s32.totalorder %s35, %s36
    %p50 = scmp.eq.s32.totalorder %s16, 1
    %p51 = por %p49, %p50
    %p53 = scmp.ne.s32.totalorder %s36, %s52
    %p54 = scmp.eq.s32.totalorder %s16, 0
    %p55 = por %p53, %p54
    %s56 = ssub.s32 %s18, %s25
    %p57 = scmp.eq.s32.totalorder %s56, 0
    %s59 = sadd.s32 %s58, 1
    %s60 = scalar_select %p57, %s58, %s59
    %p63 = pneg %p57
    %p64 = scmp.eq.s32.totalorder %s10, 1
    %p65 = por %p63, %p64
    %p66 = scmp.ne.s32.totalorder %s58, %s61
    %p67 = scmp.eq.s32.totalorder %s10, 0
    %p68 = por %p66, %p67
    %p69 = scmp.ne.s32.totalorder %s58, %s61
    %p70 = scmp.eq.s32.totalorder %s15, 1
    %p71 = por %p69, %p70
    %p72 = scmp.ne.s32.totalorder %s61, %s62
    %p73 = scmp.eq.s32.totalorder %s15, 0
    %p74 = por %p72, %p73
    %p75 = scmp.ne.s32.totalorder %s61, %s62
    %p76 = scmp.eq.s32.totalorder %s16, 1
    %p77 = por %p75, %p76
    %p79 = scmp.ne.s32.totalorder %s62, %s78
    %p80 = scmp.eq.s32.totalorder %s16, 0
    %p81 = por %p79, %p80
    %s82 = ssub.s32 %s18, %s25
    %p83 = scmp.eq.s32.totalorder %s82, 0
    %s85 = sadd.s32 %s84, 1
    %s86 = scalar_select %p83, %s84, %s85
    %p89 = pneg %p83
    %p90 = scmp.eq.s32.totalorder %s10, 1
    %p91 = por %p89, %p90
    %p92 = scmp.ne.s32.totalorder %s84, %s87
    %p93 = scmp.eq.s32.totalorder %s10, 0
    %p94 = por %p92, %p93
    %p95 = scmp.ne.s32.totalorder %s84, %s87
    %p96 = scmp.eq.s32.totalorder %s15, 1
    %p97 = por %p95, %p96
    %p98 = scmp.ne.s32.totalorder %s87, %s88
    %p99 = scmp.eq.s32.totalorder %s15, 0
    %p100 = por %p98, %p99
    %p101 = scmp.ne.s32.totalorder %s87, %s88
    %p102 = scmp.eq.s32.totalorder %s16, 1
    %p103 = por %p101, %p102
    %p105 = scmp.ne.s32.totalorder %s88, %s104
    %p106 = scmp.eq.s32.totalorder %s16, 0
    %p107 = por %p105, %p106
    %s108 = ssub.s32 %s17, %s29
    %s109 = ssub.s32 %s18, %s25
    %s110 = sor.u32 %s108, %s109
    %p111 = scmp.eq.s32.totalorder %s110, 0
    %s113 = sadd.s32 %s112, 1
    %s114 = scalar_select %p111, %s112, %s113
    %p117 = pneg %p111
    %p118 = scmp.eq.s32.totalorder %s10, 1
    %p119 = por %p117, %p118
    %p120 = scmp.ne.s32.totalorder %s112, %s115
    %p121 = scmp.eq.s32.totalorder %s10, 0
    %p122 = por %p120, %p121
    %p123 = scmp.ne.s32.totalorder %s112, %s115
    %p124 = scmp.eq.s32.totalorder %s15, 1
    %p125 = por %p123, %p124
    %p126 = scmp.ne.s32.totalorder %s115, %s116
    %p127 = scmp.eq.s32.totalorder %s15, 0
    %p128 = por %p126, %p127
    %p129 = scmp.ne.s32.totalorder %s115, %s116
    %p130 = scmp.eq.s32.totalorder %s16, 1
    %p131 = por %p129, %p130
    %p133 = scmp.ne.s32.totalorder %s116, %s132
    %p134 = scmp.eq.s32.totalorder %s16, 0
    %p135 = por %p133, %p134
    %s136 = ssub.s32 %s17, %s29
    %s137 = ssub.s32 %s18, %s25
    %s138 = sor.u32 %s136, %s137
    %p139 = scmp.eq.s32.totalorder %s138, 0
    %s141 = sadd.s32 %s140, 1
    %s142 = scalar_select %p139, %s140, %s141
    %p145 = pneg %p139
    %p146 = scmp.eq.s32.totalorder %s10, 1
    %p147 = por %p145, %p146
    %p148 = scmp.ne.s32.totalorder %s140, %s143
    %p149 = scmp.eq.s32.totalorder %s10, 0
    %p150 = por %p148, %p149
    %p151 = scmp.ne.s32.totalorder %s140, %s143
    %p152 = scmp.eq.s32.totalorder %s15, 1
    %p153 = por %p151, %p152
    %p154 = scmp.ne.s32.totalorder %s143, %s144
    %p155 = scmp.eq.s32.totalorder %s15, 0
    %p156 = por %p154, %p155
    %p157 = scmp.ne.s32.totalorder %s143, %s144
    %p158 = scmp.eq.s32.totalorder %s16, 1
    %p159 = por %p157, %p158
    %p161 = scmp.ne.s32.totalorder %s144, %s160
    %p162 = scmp.eq.s32.totalorder %s16, 0
    %p163 = por %p161, %p162
    %p164 = scmp.le.s32.totalorder 1, %s10
    %p165 = scmp.lt.s32.totalorder %s10, 3
    %p166 = pnand %p164, %p165
    %p167 = pneg %p166
    // Predicated region
    $region9: #{transformer_layer_forward.9} parent=5 // pred_check
      _
    $region10: #{transformer_layer_forward.9} parent=5 // pred_check_branch
      %169 = sbr.rel (%p166) target = $region12
    $region11: #{transformer_layer_forward.9} parent=5 // pred_region
      %s170 = ssub.s32 %s10, 1
      // Predicated region
      $region13: #{transformer_layer_forward.9} parent=11 // pred_check
        %p171 = pneg %p74
      $region14: #{transformer_layer_forward.9} parent=11 // pred_check_branch
        %173 = sbr.rel (%p171) target = $region16
      $region15: #{transformer_layer_forward.9} parent=11 // pred_region
        %p174 = scmp.lt.s32.totalorder %s20, 0
        %s175 = scalar_select %p174, %s20, 0
        %s176 = smul.addr %s175, 4
        %s177 = scalar_lea.vmem %s1, %s176
      $region16: #{transformer_layer_forward.9} parent=11 // pred_fallthru
        _
      // Predicated region
      $region17: #{transformer_layer_forward.9} parent=11 // pred_check
        %p178 = pneg %p100
      $region18: #{transformer_layer_forward.9} parent=11 // pred_check_branch
        %180 = sbr.rel (%p178) target = $region20
      $region19: #{transformer_layer_forward.9} parent=11 // pred_region
        %p181 = scmp.lt.s32.totalorder %s20, 0
        %s182 = scalar_select %p181, %s20, 0
        %s183 = scalar_lea.vmem %s2, %s182
      $region20: #{transformer_layer_forward.9} parent=11 // pred_fallthru
        _
    $region12: #{transformer_layer_forward.9} parent=5 // pred_fallthru
      _
    %p184 = scmp.lt.s32.totalorder %s10, 2
    // Predicated region
    $region21: #{transformer_layer_forward.9} parent=5 // pred_check
      %p185 = pneg %p184
    $region22: #{transformer_layer_forward.9} parent=5 // pred_check_branch
      %187 = sbr.rel (%p185) target = $region24
    $region23: #{transformer_layer_forward.9} parent=5 // pred_region
      // Predicated region
      $region25: #{transformer_layer_forward.9} parent=23 // pred_check
        %p188 = pneg %p42
      $region26: #{transformer_layer_forward.9} parent=23 // pred_check_branch
        %190 = sbr.rel (%p188) target = $region28
      $region27: #{transformer_layer_forward.9} parent=23 // pred_region
        %p191 = scmp.lt.s32.totalorder %s17, 1
        %s192 = scalar_select %p191, %s17, 1
        %s193 = smul.addr %s192, 4
        %s194 = scalar_lea.vmem %s0, %s193
      $region28: #{transformer_layer_forward.9} parent=23 // pred_fallthru
        _
      // Predicated region
      $region29: #{transformer_layer_forward.9} parent=23 // pred_check
        %p195 = pneg %p122
      $region30: #{transformer_layer_forward.9} parent=23 // pred_check_branch
        %197 = sbr.rel (%p195) target = $region32
      $region31: #{transformer_layer_forward.9} parent=23 // pred_region
        %p198 = scmp.lt.s32.totalorder %s17, 1
        %s199 = scalar_select %p198, %s17, 1
        %p200 = scmp.lt.s32.totalorder %s18, 0
        %s201 = scalar_select %p200, %s18, 0
        %s202 = sadd.s32 %s201, %s199
        %s203 = smul.addr %s202, 4
        %s204 = scalar_lea.vmem %s3, %s203
      $region32: #{transformer_layer_forward.9} parent=23 // pred_fallthru
        _
    $region24: #{transformer_layer_forward.9} parent=5 // pred_fallthru
      _
    %p205 = scmp.le.s32.totalorder 1, %s10
    %p206 = scmp.lt.s32.totalorder %s10, 3
    %p207 = pnand %p205, %p206
    %p208 = pneg %p207
    // Predicated region
    $region33: #{transformer_layer_forward.9} parent=5 // pred_check
      _
    $region34: #{transformer_layer_forward.9} parent=5 // pred_check_branch
      %210 = sbr.rel (%p207) target = $region36
    $region35: #{transformer_layer_forward.9} parent=5 // pred_region
      %s211 = ssub.s32 %s10, 1
      %p212 = scmp.lt.s32.totalorder %s19, 1
      %s213 = scalar_select %p212, %s19, 1
      %s214 = smul.addr %s213, 4
      %s215 = scalar_lea.vmem %s0, %s214
      %p216 = pneg %p48
      %p217 = pneg %p45
      %p218 = scmp.lt.s32.totalorder %s20, 0
      %s219 = scalar_select %p218, %s20, 0
      %s220 = smul.addr %s219, 4
      %s221 = scalar_lea.vmem %s1, %s220
      %p222 = pneg %p74
      %p223 = pneg %p71
      %p224 = scmp.lt.s32.totalorder %s20, 0
      %s225 = scalar_select %p224, %s20, 0
      %s226 = scalar_lea.vmem %s2, %s225
      %p227 = pneg %p100
      %p228 = pneg %p97
      %p229 = scmp.lt.s32.totalorder %s19, 1
      %s230 = scalar_select %p229, %s19, 1
      %p231 = scmp.lt.s32.totalorder %s20, 0
      %s232 = scalar_select %p231, %s20, 0
      %s233 = sadd.s32 %s232, %s230
      %s234 = smul.addr %s233, 4
      %s235 = scalar_lea.vmem %s3, %s234
      %p236 = pneg %p128
      %p237 = pneg %p125
      %p238 = pneg %p156
      %p239 = pneg %p153
      %p240 = scmp.lt.s32.totalorder %s19, 1
      %s241 = scalar_select %p240, %s19, 1
      %p242 = scmp.lt.s32.totalorder %s20, 0
      %s243 = scalar_select %p242, %s20, 0
      %s244 = sadd.s32 %s243, %s241
      %s245 = smul.addr %s244, 4
      %s246 = scalar_lea.vmem %s4, %s245
      %p247 = scmp.lt.s32.totalorder %s19, 1
      %s248 = scalar_select %p247, %s19, 1
      %s249 = smul.addr %s248, 4
      %s250 = scalar_lea.vmem %s0, %s249
      %p251 = scmp.lt.s32.totalorder %s20, 0
      %s252 = scalar_select %p251, %s20, 0
      %s253 = smul.addr %s252, 4
      %s254 = scalar_lea.vmem %s1, %s253
      %p255 = scmp.lt.s32.totalorder %s20, 0
      %s256 = scalar_select %p255, %s20, 0
      %s257 = scalar_lea.vmem %s2, %s256
      %p258 = scmp.lt.s32.totalorder %s19, 1
      %s259 = scalar_select %p258, %s19, 1
      %p260 = scmp.lt.s32.totalorder %s20, 0
      %s261 = scalar_select %p260, %s20, 0
      %s262 = sadd.s32 %s261, %s259
      %s263 = smul.addr %s262, 4
      %s264 = scalar_lea.vmem %s3, %s263
      %p265 = scmp.lt.s32.totalorder %s19, 1
      %s266 = scalar_select %p265, %s19, 1
      %p267 = scmp.lt.s32.totalorder %s20, 0
      %s268 = scalar_select %p267, %s20, 0
      %s269 = sadd.s32 %s268, %s266
      %s270 = smul.addr %s269, 4
      %s271 = scalar_lea.vmem %s4, %s270
      %v273 = vld [vmem:[%s250] sm:$0xf]
      %v274 = vld [vmem:[%s254] sm:$0xf]
      %v275 = vld [vmem:[%s254 + $0x4] sm:$0xf]
      %v276 = vld [vmem:[%s254 + $0x8] sm:$0xf]
      %v277 = vld [vmem:[%s254 + $0xc] sm:$0xf]
      %v278 = vld [vmem:[%s254 + $0x10] sm:$0xf]
      %v279 = vld [vmem:[%s254 + $0x14] sm:$0xf]
      %v280 = vld [vmem:[%s254 + $0x18] sm:$0xf]
      %v281 = vld [vmem:[%s254 + $0x1c] sm:$0xf]
      %v282 = vld [vmem:[%s254 + $0x20] sm:$0xf]
      %v283 = vld [vmem:[%s254 + $0x24] sm:$0xf]
      %v284 = vld [vmem:[%s254 + $0x28] sm:$0xf]
      %v285 = vld [vmem:[%s254 + $0x2c] sm:$0xf]
      %v286 = vld [vmem:[%s254 + $0x30] sm:$0xf]
      %v287 = vld [vmem:[%s254 + $0x34] sm:$0xf]
      %v288 = vld [vmem:[%s254 + $0x38] sm:$0xf]
      %v289 = vld [vmem:[%s254 + $0x3c] sm:$0xf]
      %v290 = vld [vmem:[%s257] sm:$0x1]
      %v292 = vlaneseq
      %v293 = vshrl.u32 %v292, 7
      %v294 = vsub.s32 0, %v293
      %v295 = vrot.slane %v290, %v294
      %v313 = vunpack.c.l.b16 %v274
      %v314 = vunpack.c.l.b16 %v275
      %v315 = vunpack.c.l.b16 %v276
      %v316 = vunpack.c.l.b16 %v277
      %v317 = vunpack.c.l.b16 %v278
      %v318 = vunpack.c.l.b16 %v279
      %v319 = vunpack.c.l.b16 %v280
      %v320 = vunpack.c.l.b16 %v281
      %v321 = vunpack.c.l.b16 %v282
      %v322 = vunpack.c.l.b16 %v283
      %v323 = vunpack.c.l.b16 %v284
      %v324 = vunpack.c.l.b16 %v285
      %v325 = vunpack.c.l.b16 %v286
      %v326 = vunpack.c.l.b16 %v287
      %v327 = vunpack.c.l.b16 %v288
      %v328 = vunpack.c.l.b16 %v289
      %v329 = vpack.c.b16 %v314, %v313
      %v330 = vpack.c.b16 %v316, %v315
      %v331 = vpack.c.b16 %v318, %v317
      %v332 = vpack.c.b16 %v320, %v319
      %v333 = vpack.c.b16 %v322, %v321
      %v334 = vpack.c.b16 %v324, %v323
      %v335 = vpack.c.b16 %v326, %v325
      %v336 = vpack.c.b16 %v328, %v327
      %345 = vmatprep.subr.bf16.mxu0 0
      %346 = vmatpush1.bf16.msra.mxu0 %v329
      %347 = vmatprep.subr.bf16.mxu0 0
      %348 = vmatpush1.bf16.msra.mxu0 %v330
      %349 = vmatprep.subr.bf16.mxu0 0
      %350 = vmatpush1.bf16.msra.mxu0 %v331
      %351 = vmatprep.subr.bf16.mxu0 0
      %352 = vmatpush1.bf16.msra.mxu0 %v332
      %353 = vmatprep.subr.bf16.mxu0 0
      %354 = vmatpush1.bf16.msra.mxu0 %v333
      %355 = vmatprep.subr.bf16.mxu0 0
      %356 = vmatpush1.bf16.msra.mxu0 %v334
      %357 = vmatprep.subr.bf16.mxu0 0
      %358 = vmatpush1.bf16.msra.mxu0 %v335
      %359 = vmatprep.subr.bf16.mxu0 0
      %360 = vmatpush1.bf16.msra.mxu0 %v336
      %361 = vmatprep.subr.bf16.mxu0 0
      %362 = vmatpush1.bf16.msra.mxu0 0
      %363 = vmatprep.subr.bf16.mxu0 0
      %364 = vmatpush1.bf16.msra.mxu0 0
      %365 = vmatprep.subr.bf16.mxu0 0
      %366 = vmatpush1.bf16.msra.mxu0 0
      %367 = vmatprep.subr.bf16.mxu0 0
      %368 = vmatpush1.bf16.msra.mxu0 0
      %369 = vmatprep.subr.bf16.mxu0 0
      %370 = vmatpush1.bf16.msra.mxu0 0
      %371 = vmatprep.subr.bf16.mxu0 0
      %372 = vmatpush1.bf16.msra.mxu0 0
      %373 = vmatprep.subr.bf16.mxu0 0
      %374 = vmatpush1.bf16.msra.mxu0 0
      %375 = vmatprep.subr.bf16.mxu0 0
      %376 = vmatpush1.bf16.msra.mxu0 0
      %377 = vmatprep.mubr.bf16.mxu0 0
      %378 = vmatmul.mubr.bf16.gmra.mrb[0].mxu0 %v273
      %v379 = vpop.f32.mrb[0].mxu0
      %v380 = vadd.f32 %v295, %v379
      %v381 = vpop.f32.mrb[0].mxu0
      %v382 = vpop.f32.mrb[0].mxu0
      %v383 = vpop.f32.mrb[0].mxu0
      %384 = vdwg.mxu0
      %v385 = vld [vmem:[%s264] sm:$0xf]
      %v386 = vunpack.c.l.bf16 %v385
      %v387 = vadd.f32 %v380, %v386
      %v388 = vpack.c.bf16 %v387, %v387
      %389 = vst [vmem:[%s271] sm:$0xf] %v388
      %p390 = scmp.lt.s32.totalorder %s19, 1
      %s391 = scalar_select %p390, %s19, 1
      %p392 = scmp.lt.s32.totalorder %s20, 0
      %s393 = scalar_select %p392, %s20, 0
      %s394 = sadd.s32 %s393, %s391
      %s395 = smul.addr %s394, 4
      %s396 = scalar_lea.vmem %s4, %s395
      // Predicated region
      $region37: #{transformer_layer_forward.9} parent=35 // pred_check
        %p397 = pneg %p153
      $region38: #{transformer_layer_forward.9} parent=35 // pred_check_branch
        %399 = sbr.rel (%p397) target = $region40
      $region39: #{transformer_layer_forward.9} parent=35 // pred_region
        _
      $region40: #{transformer_layer_forward.9} parent=35 // pred_fallthru
        _
    $region36: #{transformer_layer_forward.9} parent=5 // pred_fallthru
      _
    %p400 = scmp.le.s32.totalorder 2, %s10
    // Predicated region
    $region41: #{transformer_layer_forward.9} parent=5 // pred_check
      %p401 = pneg %p400
    $region42: #{transformer_layer_forward.9} parent=5 // pred_check_branch
      %403 = sbr.rel (%p401) target = $region44
    $region43: #{transformer_layer_forward.9} parent=5 // pred_region
      %s404 = ssub.s32 %s10, 2
      // Predicated region
      $region45: #{transformer_layer_forward.9} parent=43 // pred_check
        %p405 = pneg %p159
      $region46: #{transformer_layer_forward.9} parent=43 // pred_check_branch
        %407 = sbr.rel (%p405) target = $region48
      $region47: #{transformer_layer_forward.9} parent=43 // pred_region
        %p408 = scmp.lt.s32.totalorder %s21, 1
        %s409 = scalar_select %p408, %s21, 1
        %p410 = scmp.lt.s32.totalorder %s22, 0
        %s411 = scalar_select %p410, %s22, 0
        %s412 = sadd.s32 %s411, %s409
        %s413 = smul.addr %s412, 4
        %s414 = scalar_lea.vmem %s4, %s413
      $region48: #{transformer_layer_forward.9} parent=43 // pred_fallthru
        _
    $region44: #{transformer_layer_forward.9} parent=5 // pred_fallthru
      _
  $region6: #{transformer_layer_forward.9} parent=0 // loop_footer
    %s14 = sadd.s32 1, %s10
  $region7: #{transformer_layer_forward.9} parent=0 // loop_footer_branch
    %9 = sbr.rel target = $region3
  $region8: #{transformer_layer_forward.9} parent=0 // loop_exit
    _

// kernel: transformer_layer_forward.13
$region0: #{transformer_layer_forward.13}
  #allocation0 [shape = 'u32[]', space=smem, size = 0x4, offset = 0x4, fixed_abs, tag = 'smem constant byte address 0x4 - core index']
  #allocation1 [shape = 'u32[144,128]{1,0:T(1,128)}', space=vmem, size = 0x12000, scoped, tag = 'internal scratch']
  %s0 = inlined_call_operand.vmem [shape: bf16[16,128], index: 0, kind: input, shape index: {}]
  %s1 = inlined_call_operand.vmem [shape: f32[1,128], index: 1, kind: input, shape index: {}]
  %s2 = inlined_call_operand.vmem [shape: f32[1,128], index: 2, kind: input, shape index: {}]
  %s3 = inlined_call_operand.vmem [shape: f32[16,128], index: 3, kind: output, shape index: {}]
  %s4 = sld [smem:[#allocation0]]
  $region45: #{transformer_layer_forward.13} parent=0
    _
  %s6 = ssub.s32 1, %s4
  %s7 = scalar_select 0, %s6, %s4
  loop: start=0, step=1, limit=4
  $region2: #{transformer_layer_forward.13} parent=0 // loop_pre_header
    _
  $region3: #{transformer_layer_forward.13} parent=0 // loop_header
    %s9 = sphi 0, %s13
    %p10 = scmp.ge.s32.totalorder %s9, 4
    %s19 = sphi 0, %s21
    %s22 = sphi 0, %s19
    %s23 = sphi 0, %s22
    %s39 = sphi 0, %s23
    %s43 = sphi 0, %s43
    %s45 = sphi 0, %s43
    %s46 = sphi 0, %s45
    %s60 = sphi 0, %s46
    %s64 = sphi 0, %s64
    %s66 = sphi 0, %s64
    %s67 = sphi 0, %s66
    %s81 = sphi 0, %s67
    %s87 = sphi 0, %s89
    %s90 = sphi 0, %s87
    %s91 = sphi 0, %s90
    %s107 = sphi 0, %s91
  $region4: #{transformer_layer_forward.13} parent=0 // loop_header_branch
    %12 = sbr.rel (%p10) target = $region8
  $region5: #{transformer_layer_forward.13} parent=0 // loop_body
    %s14 = ssub.s32 %s9, 1
    %s15 = ssub.s32 %s9, 2
    %s16 = sadd.s32 %s9, 1
    %s17 = ssub.s32 %s9, %s16
    %p18 = scmp.eq.s32.totalorder %s17, 0
    %s20 = sadd.s32 %s19, 1
    %s21 = scalar_select %p18, %s19, %s20
    %p24 = pneg %p18
    %p25 = scmp.eq.s32.totalorder %s9, 1
    %p26 = por %p24, %p25
    %p27 = scmp.ne.s32.totalorder %s19, %s22
    %p28 = scmp.eq.s32.totalorder %s9, 0
    %p29 = por %p27, %p28
    %p30 = scmp.ne.s32.totalorder %s19, %s22
    %p31 = scmp.eq.s32.totalorder %s14, 1
    %p32 = por %p30, %p31
    %p33 = scmp.ne.s32.totalorder %s22, %s23
    %p34 = scmp.eq.s32.totalorder %s14, 0
    %p35 = por %p33, %p34
    %p36 = scmp.ne.s32.totalorder %s22, %s23
    %p37 = scmp.eq.s32.totalorder %s15, 1
    %p38 = por %p36, %p37
    %p40 = scmp.ne.s32.totalorder %s23, %s39
    %p41 = scmp.eq.s32.totalorder %s15, 0
    %p42 = por %p40, %p41
    %s44 = sadd.s32 %s43, 1
    %p47 = scmp.eq.s32.totalorder %s9, 1
    %p48 = scmp.ne.s32.totalorder %s43, %s45
    %p49 = scmp.eq.s32.totalorder %s9, 0
    %p50 = por %p48, %p49
    %p51 = scmp.ne.s32.totalorder %s43, %s45
    %p52 = scmp.eq.s32.totalorder %s14, 1
    %p53 = por %p51, %p52
    %p54 = scmp.ne.s32.totalorder %s45, %s46
    %p55 = scmp.eq.s32.totalorder %s14, 0
    %p56 = por %p54, %p55
    %p57 = scmp.ne.s32.totalorder %s45, %s46
    %p58 = scmp.eq.s32.totalorder %s15, 1
    %p59 = por %p57, %p58
    %p61 = scmp.ne.s32.totalorder %s46, %s60
    %p62 = scmp.eq.s32.totalorder %s15, 0
    %p63 = por %p61, %p62
    %s65 = sadd.s32 %s64, 1
    %p68 = scmp.eq.s32.totalorder %s9, 1
    %p69 = scmp.ne.s32.totalorder %s64, %s66
    %p70 = scmp.eq.s32.totalorder %s9, 0
    %p71 = por %p69, %p70
    %p72 = scmp.ne.s32.totalorder %s64, %s66
    %p73 = scmp.eq.s32.totalorder %s14, 1
    %p74 = por %p72, %p73
    %p75 = scmp.ne.s32.totalorder %s66, %s67
    %p76 = scmp.eq.s32.totalorder %s14, 0
    %p77 = por %p75, %p76
    %p78 = scmp.ne.s32.totalorder %s66, %s67
    %p79 = scmp.eq.s32.totalorder %s15, 1
    %p80 = por %p78, %p79
    %p82 = scmp.ne.s32.totalorder %s67, %s81
    %p83 = scmp.eq.s32.totalorder %s15, 0
    %p84 = por %p82, %p83
    %s85 = ssub.s32 %s9, %s16
    %p86 = scmp.eq.s32.totalorder %s85, 0
    %s88 = sadd.s32 %s87, 1
    %s89 = scalar_select %p86, %s87, %s88
    %p92 = pneg %p86
    %p93 = scmp.eq.s32.totalorder %s9, 1
    %p94 = por %p92, %p93
    %p95 = scmp.ne.s32.totalorder %s87, %s90
    %p96 = scmp.eq.s32.totalorder %s9, 0
    %p97 = por %p95, %p96
    %p98 = scmp.ne.s32.totalorder %s87, %s90
    %p99 = scmp.eq.s32.totalorder %s14, 1
    %p100 = por %p98, %p99
    %p101 = scmp.ne.s32.totalorder %s90, %s91
    %p102 = scmp.eq.s32.totalorder %s14, 0
    %p103 = por %p101, %p102
    %p104 = scmp.ne.s32.totalorder %s90, %s91
    %p105 = scmp.eq.s32.totalorder %s15, 1
    %p106 = por %p104, %p105
    %p108 = scmp.ne.s32.totalorder %s91, %s107
    %p109 = scmp.eq.s32.totalorder %s15, 0
    %p110 = por %p108, %p109
    %p111 = scmp.le.s32.totalorder 1, %s9
    %p112 = scmp.lt.s32.totalorder %s9, 3
    %p113 = pnand %p111, %p112
    %p114 = pneg %p113
    // Predicated region
    $region9: #{transformer_layer_forward.13} parent=5 // pred_check
      _
    $region10: #{transformer_layer_forward.13} parent=5 // pred_check_branch
      %116 = sbr.rel (%p113) target = $region12
    $region11: #{transformer_layer_forward.13} parent=5 // pred_region
      %s117 = ssub.s32 %s9, 1
      // Predicated region
      $region13: #{transformer_layer_forward.13} parent=11 // pred_check
        %p118 = pneg %p56
      $region14: #{transformer_layer_forward.13} parent=11 // pred_check_branch
        %120 = sbr.rel (%p118) target = $region16
      $region15: #{transformer_layer_forward.13} parent=11 // pred_region
        _
      $region16: #{transformer_layer_forward.13} parent=11 // pred_fallthru
        _
      // Predicated region
      $region17: #{transformer_layer_forward.13} parent=11 // pred_check
        %p121 = pneg %p77
      $region18: #{transformer_layer_forward.13} parent=11 // pred_check_branch
        %123 = sbr.rel (%p121) target = $region20
      $region19: #{transformer_layer_forward.13} parent=11 // pred_region
        _
      $region20: #{transformer_layer_forward.13} parent=11 // pred_fallthru
        _
    $region12: #{transformer_layer_forward.13} parent=5 // pred_fallthru
      _
    %p124 = scmp.lt.s32.totalorder %s9, 2
    // Predicated region
    $region21: #{transformer_layer_forward.13} parent=5 // pred_check
      %p125 = pneg %p124
    $region22: #{transformer_layer_forward.13} parent=5 // pred_check_branch
      %127 = sbr.rel (%p125) target = $region24
    $region23: #{transformer_layer_forward.13} parent=5 // pred_region
      // Predicated region
      $region25: #{transformer_layer_forward.13} parent=23 // pred_check
        %p128 = pneg %p29
      $region26: #{transformer_layer_forward.13} parent=23 // pred_check_branch
        %130 = sbr.rel (%p128) target = $region28
      $region27: #{transformer_layer_forward.13} parent=23 // pred_region
        %p131 = scmp.lt.s32.totalorder %s9, 1
        %s132 = scalar_select %p131, %s9, 1
        %s133 = smul.addr %s132, 4
        %s134 = scalar_lea.vmem %s0, %s133
      $region28: #{transformer_layer_forward.13} parent=23 // pred_fallthru
        _
    $region24: #{transformer_layer_forward.13} parent=5 // pred_fallthru
      _
    %p135 = scmp.le.s32.totalorder 1, %s9
    %p136 = scmp.lt.s32.totalorder %s9, 3
    %p137 = pnand %p135, %p136
    %p138 = pneg %p137
    // Predicated region
    $region29: #{transformer_layer_forward.13} parent=5 // pred_check
      _
    $region30: #{transformer_layer_forward.13} parent=5 // pred_check_branch
      %140 = sbr.rel (%p137) target = $region32
    $region31: #{transformer_layer_forward.13} parent=5 // pred_region
      %s141 = ssub.s32 %s9, 1
      %p142 = scmp.lt.s32.totalorder %s14, 1
      %s143 = scalar_select %p142, %s14, 1
      %s144 = smul.addr %s143, 4
      %s145 = scalar_lea.vmem %s0, %s144
      %p146 = pneg %p35
      %p147 = pneg %p32
      %p148 = pneg %p56
      %p149 = pneg %p53
      %p150 = pneg %p77
      %p151 = pneg %p74
      %p152 = pneg %p103
      %p153 = pneg %p100
      %p154 = scmp.lt.s32.totalorder %s14, 1
      %s155 = scalar_select %p154, %s14, 1
      %s156 = smul.addr %s155, 8
      %s157 = scalar_lea.vmem %s3, %s156
      %p158 = scmp.lt.s32.totalorder %s14, 1
      %s159 = scalar_select %p158, %s14, 1
      %s160 = smul.addr %s159, 4
      %s161 = scalar_lea.vmem %s0, %s160
      %p162 = scmp.lt.s32.totalorder %s14, 1
      %s163 = scalar_select %p162, %s14, 1
      %s164 = smul.addr %s163, 8
      %s165 = scalar_lea.vmem %s3, %s164
      %v166 = vld [vmem:[%s161] sm:$0xf]
      %v167 = vunpack.c.l.bf16 %v166
      %v168 = vlaneseq
      %v169 = vand.u32 %v168, 127
      %vm170 = vcmp.lt.s32.totalorder %v169, 32
      %v171 = vsel %vm170, %v167, 0.0
      %172 = vadd.xlane.f32.xlu0 %v171
      %v173 = vpop.xlane.xlu0 %172
      %v174 = vmul.f32 %v173, 0.03125
      %v175 = vsub.f32 %v167, %v174
      %v176 = vsel %vm170, %v175, 0.0
      %v177 = vmul.f32 %v176, %v176
      %178 = vadd.xlane.f32.xlu0 %v177
      %v179 = vpop.xlane.xlu0 %178
      %v180 = vmul.f32 %v179, 0.03125
      %v181 = vadd.f32 %v180, 1e-05
      %v182 = vrsqrt.pop %v181
      %v183 = vmul.f32 %v175, %v182
      %v184 = vld [vmem:[%s1] sm:$0x1]
      %v186 = vlaneseq
      %v187 = vshrl.u32 %v186, 7
      %v188 = vsub.s32 0, %v187
      %v189 = vrot.slane %v184, %v188
      %v191 = vmul.f32 %v183, %v189
      %v192 = vld [vmem:[%s2] sm:$0x1]
      %v194 = vlaneseq
      %v195 = vshrl.u32 %v194, 7
      %v196 = vsub.s32 0, %v195
      %v197 = vrot.slane %v192, %v196
      %v199 = vadd.f32 %v191, %v197
      %200 = vst [vmem:[%s165] sm:$0xff] %v199
      %p201 = scmp.lt.s32.totalorder %s14, 1
      %s202 = scalar_select %p201, %s14, 1
      %s203 = smul.addr %s202, 8
      %s204 = scalar_lea.vmem %s3, %s203
      // Predicated region
      $region33: #{transformer_layer_forward.13} parent=31 // pred_check
        %p205 = pneg %p100
      $region34: #{transformer_layer_forward.13} parent=31 // pred_check_branch
        %207 = sbr.rel (%p205) target = $region36
      $region35: #{transformer_layer_forward.13} parent=31 // pred_region
        _
      $region36: #{transformer_layer_forward.13} parent=31 // pred_fallthru
        _
    $region32: #{transformer_layer_forward.13} parent=5 // pred_fallthru
      _
    %p208 = scmp.le.s32.totalorder 2, %s9
    // Predicated region
    $region37: #{transformer_layer_forward.13} parent=5 // pred_check
      %p209 = pneg %p208
    $region38: #{transformer_layer_forward.13} parent=5 // pred_check_branch
      %211 = sbr.rel (%p209) target = $region40
    $region39: #{transformer_layer_forward.13} parent=5 // pred_region
      %s212 = ssub.s32 %s9, 2
      // Predicated region
      $region41: #{transformer_layer_forward.13} parent=39 // pred_check
        %p213 = pneg %p106
      $region42: #{transformer_layer_forward.13} parent=39 // pred_check_branch
        %215 = sbr.rel (%p213) target = $region44
      $region43: #{transformer_layer_forward.13} parent=39 // pred_region
        %p216 = scmp.lt.s32.totalorder %s15, 1
        %s217 = scalar_select %p216, %s15, 1
        %s218 = smul.addr %s217, 8
        %s219 = scalar_lea.vmem %s3, %s218
      $region44: #{transformer_layer_forward.13} parent=39 // pred_fallthru
        _
    $region40: #{transformer_layer_forward.13} parent=5 // pred_fallthru
      _
  $region6: #{transformer_layer_forward.13} parent=0 // loop_footer
    %s13 = sadd.s32 1, %s9
  $region7: #{transformer_layer_forward.13} parent=0 // loop_footer_branch
    %8 = sbr.rel target = $region3
  $region8: #{transformer_layer_forward.13} parent=0 // loop_exit
    _

// kernel: transformer_layer_forward.11
$region0: #{transformer_layer_forward.11}
  #allocation0 [shape = 'u32[]', space=smem, size = 0x4, offset = 0x4, fixed_abs, tag = 'smem constant byte address 0x4 - core index']
  #allocation1 [shape = 'u32[144,128]{1,0:T(1,128)}', space=vmem, size = 0x12000, scoped, tag = 'internal scratch']
  %s0 = inlined_call_operand.vmem [shape: bf16[16,128], index: 0, kind: input, shape index: {}]
  %s1 = inlined_call_operand.vmem [shape: bf16[128,128], index: 1, kind: input, shape index: {}]
  %s2 = inlined_call_operand.vmem [shape: f32[1,128], index: 2, kind: input, shape index: {}]
  %s3 = inlined_call_operand.vmem [shape: bf16[16,128], index: 3, kind: output, shape index: {}]
  %s4 = sld [smem:[#allocation0]]
  $region45: #{transformer_layer_forward.11} parent=0
    _
  %s6 = ssub.s32 1, %s4
  %s7 = scalar_select 0, %s6, %s4
  loop: start=0, step=1, limit=4
  $region2: #{transformer_layer_forward.11} parent=0 // loop_pre_header
    _
  $region3: #{transformer_layer_forward.11} parent=0 // loop_header
    %s9 = sphi 0, %s13
    %p10 = scmp.ge.s32.totalorder %s9, 4
    %s16 = sphi 0, %s28
    %s17 = sphi 0, %s24
    %s18 = sphi 0, %s16
    %s19 = sphi 0, %s17
    %s20 = sphi 0, %s18
    %s21 = sphi 0, %s19
    %s31 = sphi 0, %s33
    %s34 = sphi 0, %s31
    %s35 = sphi 0, %s34
    %s51 = sphi 0, %s35
    %s57 = sphi 0, %s59
    %s60 = sphi 0, %s57
    %s61 = sphi 0, %s60
    %s77 = sphi 0, %s61
    %s83 = sphi 0, %s85
    %s86 = sphi 0, %s83
    %s87 = sphi 0, %s86
    %s103 = sphi 0, %s87
    %s111 = sphi 0, %s113
    %s114 = sphi 0, %s111
    %s115 = sphi 0, %s114
    %s131 = sphi 0, %s115
  $region4: #{transformer_layer_forward.11} parent=0 // loop_header_branch
    %12 = sbr.rel (%p10) target = $region8
  $region5: #{transformer_layer_forward.11} parent=0 // loop_body
    %s14 = ssub.s32 %s9, 1
    %s15 = ssub.s32 %s9, 2
    %s22 = sadd.s32 1, %s17
    %p23 = scmp.ge.s32.totalorder %s22, 1
    %s24 = scalar_select %p23, 0, %s22
    %s25 = sadd.s32 1, %s16
    %s26 = scalar_select %p23, %s25, %s16
    %p27 = scmp.ge.s32.totalorder %s26, 2
    %s28 = scalar_select %p27, 0, %s26
    %s29 = ssub.s32 %s16, %s28
    %p30 = scmp.eq.s32.totalorder %s29, 0
    %s32 = sadd.s32 %s31, 1
    %s33 = scalar_select %p30, %s31, %s32
    %p36 = pneg %p30
    %p37 = scmp.eq.s32.totalorder %s9, 1
    %p38 = por %p36, %p37
    %p39 = scmp.ne.s32.totalorder %s31, %s34
    %p40 = scmp.eq.s32.totalorder %s9, 0
    %p41 = por %p39, %p40
    %p42 = scmp.ne.s32.totalorder %s31, %s34
    %p43 = scmp.eq.s32.totalorder %s14, 1
    %p44 = por %p42, %p43
    %p45 = scmp.ne.s32.totalorder %s34, %s35
    %p46 = scmp.eq.s32.totalorder %s14, 0
    %p47 = por %p45, %p46
    %p48 = scmp.ne.s32.totalorder %s34, %s35
    %p49 = scmp.eq.s32.totalorder %s15, 1
    %p50 = por %p48, %p49
    %p52 = scmp.ne.s32.totalorder %s35, %s51
    %p53 = scmp.eq.s32.totalorder %s15, 0
    %p54 = por %p52, %p53
    %s55 = ssub.s32 %s17, %s24
    %p56 = scmp.eq.s32.totalorder %s55, 0
    %s58 = sadd.s32 %s57, 1
    %s59 = scalar_select %p56, %s57, %s58
    %p62 = pneg %p56
    %p63 = scmp.eq.s32.totalorder %s9, 1
    %p64 = por %p62, %p63
    %p65 = scmp.ne.s32.totalorder %s57, %s60
    %p66 = scmp.eq.s32.totalorder %s9, 0
    %p67 = por %p65, %p66
    %p68 = scmp.ne.s32.totalorder %s57, %s60
    %p69 = scmp.eq.s32.totalorder %s14, 1
    %p70 = por %p68, %p69
    %p71 = scmp.ne.s32.totalorder %s60, %s61
    %p72 = scmp.eq.s32.totalorder %s14, 0
    %p73 = por %p71, %p72
    %p74 = scmp.ne.s32.totalorder %s60, %s61
    %p75 = scmp.eq.s32.totalorder %s15, 1
    %p76 = por %p74, %p75
    %p78 = scmp.ne.s32.totalorder %s61, %s77
    %p79 = scmp.eq.s32.totalorder %s15, 0
    %p80 = por %p78, %p79
    %s81 = ssub.s32 %s17, %s24
    %p82 = scmp.eq.s32.totalorder %s81, 0
    %s84 = sadd.s32 %s83, 1
    %s85 = scalar_select %p82, %s83, %s84
    %p88 = pneg %p82
    %p89 = scmp.eq.s32.totalorder %s9, 1
    %p90 = por %p88, %p89
    %p91 = scmp.ne.s32.totalorder %s83, %s86
    %p92 = scmp.eq.s32.totalorder %s9, 0
    %p93 = por %p91, %p92
    %p94 = scmp.ne.s32.totalorder %s83, %s86
    %p95 = scmp.eq.s32.totalorder %s14, 1
    %p96 = por %p94, %p95
    %p97 = scmp.ne.s32.totalorder %s86, %s87
    %p98 = scmp.eq.s32.totalorder %s14, 0
    %p99 = por %p97, %p98
    %p100 = scmp.ne.s32.totalorder %s86, %s87
    %p101 = scmp.eq.s32.totalorder %s15, 1
    %p102 = por %p100, %p101
    %p104 = scmp.ne.s32.totalorder %s87, %s103
    %p105 = scmp.eq.s32.totalorder %s15, 0
    %p106 = por %p104, %p105
    %s107 = ssub.s32 %s16, %s28
    %s108 = ssub.s32 %s17, %s24
    %s109 = sor.u32 %s107, %s108
    %p110 = scmp.eq.s32.totalorder %s109, 0
    %s112 = sadd.s32 %s111, 1
    %s113 = scalar_select %p110, %s111, %s112
    %p116 = pneg %p110
    %p117 = scmp.eq.s32.totalorder %s9, 1
    %p118 = por %p116, %p117
    %p119 = scmp.ne.s32.totalorder %s111, %s114
    %p120 = scmp.eq.s32.totalorder %s9, 0
    %p121 = por %p119, %p120
    %p122 = scmp.ne.s32.totalorder %s111, %s114
    %p123 = scmp.eq.s32.totalorder %s14, 1
    %p124 = por %p122, %p123
    %p125 = scmp.ne.s32.totalorder %s114, %s115
    %p126 = scmp.eq.s32.totalorder %s14, 0
    %p127 = por %p125, %p126
    %p128 = scmp.ne.s32.totalorder %s114, %s115
    %p129 = scmp.eq.s32.totalorder %s15, 1
    %p130 = por %p128, %p129
    %p132 = scmp.ne.s32.totalorder %s115, %s131
    %p133 = scmp.eq.s32.totalorder %s15, 0
    %p134 = por %p132, %p133
    %p135 = scmp.le.s32.totalorder 1, %s9
    %p136 = scmp.lt.s32.totalorder %s9, 3
    %p137 = pnand %p135, %p136
    %p138 = pneg %p137
    // Predicated region
    $region9: #{transformer_layer_forward.11} parent=5 // pred_check
      _
    $region10: #{transformer_layer_forward.11} parent=5 // pred_check_branch
      %140 = sbr.rel (%p137) target = $region12
    $region11: #{transformer_layer_forward.11} parent=5 // pred_region
      %s141 = ssub.s32 %s9, 1
      // Predicated region
      $region13: #{transformer_layer_forward.11} parent=11 // pred_check
        %p142 = pneg %p73
      $region14: #{transformer_layer_forward.11} parent=11 // pred_check_branch
        %144 = sbr.rel (%p142) target = $region16
      $region15: #{transformer_layer_forward.11} parent=11 // pred_region
        %p145 = scmp.lt.s32.totalorder %s19, 0
        %s146 = scalar_select %p145, %s19, 0
        %s147 = smul.addr %s146, 4
        %s148 = scalar_lea.vmem %s1, %s147
      $region16: #{transformer_layer_forward.11} parent=11 // pred_fallthru
        _
      // Predicated region
      $region17: #{transformer_layer_forward.11} parent=11 // pred_check
        %p149 = pneg %p99
      $region18: #{transformer_layer_forward.11} parent=11 // pred_check_branch
        %151 = sbr.rel (%p149) target = $region20
      $region19: #{transformer_layer_forward.11} parent=11 // pred_region
        %p152 = scmp.lt.s32.totalorder %s19, 0
        %s153 = scalar_select %p152, %s19, 0
        %s154 = scalar_lea.vmem %s2, %s153
      $region20: #{transformer_layer_forward.11} parent=11 // pred_fallthru
        _
    $region12: #{transformer_layer_forward.11} parent=5 // pred_fallthru
      _
    %p155 = scmp.lt.s32.totalorder %s9, 2
    // Predicated region
    $region21: #{transformer_layer_forward.11} parent=5 // pred_check
      %p156 = pneg %p155
    $region22: #{transformer_layer_forward.11} parent=5 // pred_check_branch
      %158 = sbr.rel (%p156) target = $region24
    $region23: #{transformer_layer_forward.11} parent=5 // pred_region
      // Predicated region
      $region25: #{transformer_layer_forward.11} parent=23 // pred_check
        %p159 = pneg %p41
      $region26: #{transformer_layer_forward.11} parent=23 // pred_check_branch
        %161 = sbr.rel (%p159) target = $region28
      $region27: #{transformer_layer_forward.11} parent=23 // pred_region
        %p162 = scmp.lt.s32.totalorder %s16, 1
        %s163 = scalar_select %p162, %s16, 1
        %s164 = smul.addr %s163, 4
        %s165 = scalar_lea.vmem %s0, %s164
      $region28: #{transformer_layer_forward.11} parent=23 // pred_fallthru
        _
    $region24: #{transformer_layer_forward.11} parent=5 // pred_fallthru
      _
    %p166 = scmp.le.s32.totalorder 1, %s9
    %p167 = scmp.lt.s32.totalorder %s9, 3
    %p168 = pnand %p166, %p167
    %p169 = pneg %p168
    // Predicated region
    $region29: #{transformer_layer_forward.11} parent=5 // pred_check
      _
    $region30: #{transformer_layer_forward.11} parent=5 // pred_check_branch
      %171 = sbr.rel (%p168) target = $region32
    $region31: #{transformer_layer_forward.11} parent=5 // pred_region
      %s172 = ssub.s32 %s9, 1
      %p173 = scmp.lt.s32.totalorder %s18, 1
      %s174 = scalar_select %p173, %s18, 1
      %s175 = smul.addr %s174, 4
      %s176 = scalar_lea.vmem %s0, %s175
      %p177 = pneg %p47
      %p178 = pneg %p44
      %p179 = scmp.lt.s32.totalorder %s19, 0
      %s180 = scalar_select %p179, %s19, 0
      %s181 = smul.addr %s180, 4
      %s182 = scalar_lea.vmem %s1, %s181
      %p183 = pneg %p73
      %p184 = pneg %p70
      %p185 = scmp.lt.s32.totalorder %s19, 0
      %s186 = scalar_select %p185, %s19, 0
      %s187 = scalar_lea.vmem %s2, %s186
      %p188 = pneg %p99
      %p189 = pneg %p96
      %p190 = pneg %p127
      %p191 = pneg %p124
      %p192 = scmp.lt.s32.totalorder %s18, 1
      %s193 = scalar_select %p192, %s18, 1
      %p194 = scmp.lt.s32.totalorder %s19, 0
      %s195 = scalar_select %p194, %s19, 0
      %s196 = sadd.s32 %s195, %s193
      %s197 = smul.addr %s196, 4
      %s198 = scalar_lea.vmem %s3, %s197
      %p199 = scmp.lt.s32.totalorder %s18, 1
      %s200 = scalar_select %p199, %s18, 1
      %s201 = smul.addr %s200, 4
      %s202 = scalar_lea.vmem %s0, %s201
      %p203 = scmp.lt.s32.totalorder %s19, 0
      %s204 = scalar_select %p203, %s19, 0
      %s205 = smul.addr %s204, 4
      %s206 = scalar_lea.vmem %s1, %s205
      %p207 = scmp.lt.s32.totalorder %s19, 0
      %s208 = scalar_select %p207, %s19, 0
      %s209 = scalar_lea.vmem %s2, %s208
      %p210 = scmp.lt.s32.totalorder %s18, 1
      %s211 = scalar_select %p210, %s18, 1
      %p212 = scmp.lt.s32.totalorder %s19, 0
      %s213 = scalar_select %p212, %s19, 0
      %s214 = sadd.s32 %s213, %s211
      %s215 = smul.addr %s214, 4
      %s216 = scalar_lea.vmem %s3, %s215
      %v218 = vld [vmem:[%s202] sm:$0xf]
      %v219 = vld [vmem:[%s206] sm:$0xf]
      %v220 = vld [vmem:[%s206 + $0x4] sm:$0xf]
      %v221 = vld [vmem:[%s206 + $0x8] sm:$0xf]
      %v222 = vld [vmem:[%s206 + $0xc] sm:$0xf]
      %v223 = vld [vmem:[%s206 + $0x10] sm:$0xf]
      %v224 = vld [vmem:[%s206 + $0x14] sm:$0xf]
      %v225 = vld [vmem:[%s206 + $0x18] sm:$0xf]
      %v226 = vld [vmem:[%s206 + $0x1c] sm:$0xf]
      %v227 = vld [vmem:[%s206 + $0x20] sm:$0xf]
      %v228 = vld [vmem:[%s206 + $0x24] sm:$0xf]
      %v229 = vld [vmem:[%s206 + $0x28] sm:$0xf]
      %v230 = vld [vmem:[%s206 + $0x2c] sm:$0xf]
      %v231 = vld [vmem:[%s206 + $0x30] sm:$0xf]
      %v232 = vld [vmem:[%s206 + $0x34] sm:$0xf]
      %v233 = vld [vmem:[%s206 + $0x38] sm:$0xf]
      %v234 = vld [vmem:[%s206 + $0x3c] sm:$0xf]
      %v235 = vld [vmem:[%s209] sm:$0x1]
      %v237 = vlaneseq
      %v238 = vshrl.u32 %v237, 7
      %v239 = vsub.s32 0, %v238
      %v240 = vrot.slane %v235, %v239
      %v258 = vunpack.c.l.b16 %v219
      %v259 = vunpack.c.l.b16 %v220
      %v260 = vunpack.c.l.b16 %v221
      %v261 = vunpack.c.l.b16 %v222
      %v262 = vunpack.c.l.b16 %v223
      %v263 = vunpack.c.l.b16 %v224
      %v264 = vunpack.c.l.b16 %v225
      %v265 = vunpack.c.l.b16 %v226
      %v266 = vunpack.c.l.b16 %v227
      %v267 = vunpack.c.l.b16 %v228
      %v268 = vunpack.c.l.b16 %v229
      %v269 = vunpack.c.l.b16 %v230
      %v270 = vunpack.c.l.b16 %v231
      %v271 = vunpack.c.l.b16 %v232
      %v272 = vunpack.c.l.b16 %v233
      %v273 = vunpack.c.l.b16 %v234
      %v274 = vpack.c.b16 %v259, %v258
      %v275 = vpack.c.b16 %v261, %v260
      %v276 = vpack.c.b16 %v263, %v262
      %v277 = vpack.c.b16 %v265, %v264
      %v278 = vpack.c.b16 %v267, %v266
      %v279 = vpack.c.b16 %v269, %v268
      %v280 = vpack.c.b16 %v271, %v270
      %v281 = vpack.c.b16 %v273, %v272
      %290 = vmatprep.subr.bf16.mxu0 0
      %291 = vmatpush1.bf16.msra.mxu0 %v274
      %292 = vmatprep.subr.bf16.mxu0 0
      %293 = vmatpush1.bf16.msra.mxu0 %v275
      %294 = vmatprep.subr.bf16.mxu0 0
      %295 = vmatpush1.bf16.msra.mxu0 %v276
      %296 = vmatprep.subr.bf16.mxu0 0
      %297 = vmatpush1.bf16.msra.mxu0 %v277
      %298 = vmatprep.subr.bf16.mxu0 0
      %299 = vmatpush1.bf16.msra.mxu0 %v278
      %300 = vmatprep.subr.bf16.mxu0 0
      %301 = vmatpush1.bf16.msra.mxu0 %v279
      %302 = vmatprep.subr.bf16.mxu0 0
      %303 = vmatpush1.bf16.msra.mxu0 %v280
      %304 = vmatprep.subr.bf16.mxu0 0
      %305 = vmatpush1.bf16.msra.mxu0 %v281
      %306 = vmatprep.subr.bf16.mxu0 0
      %307 = vmatpush1.bf16.msra.mxu0 0
      %308 = vmatprep.subr.bf16.mxu0 0
      %309 = vmatpush1.bf16.msra.mxu0 0
      %310 = vmatprep.subr.bf16.mxu0 0
      %311 = vmatpush1.bf16.msra.mxu0 0
      %312 = vmatprep.subr.bf16.mxu0 0
      %313 = vmatpush1.bf16.msra.mxu0 0
      %314 = vmatprep.subr.bf16.mxu0 0
      %315 = vmatpush1.bf16.msra.mxu0 0
      %316 = vmatprep.subr.bf16.mxu0 0
      %317 = vmatpush1.bf16.msra.mxu0 0
      %318 = vmatprep.subr.bf16.mxu0 0
      %319 = vmatpush1.bf16.msra.mxu0 0
      %320 = vmatprep.subr.bf16.mxu0 0
      %321 = vmatpush1.bf16.msra.mxu0 0
      %322 = vmatprep.mubr.bf16.mxu0 0
      %323 = vmatmul.mubr.bf16.gmra.mrb[0].mxu0 %v218
      %v324 = vpop.f32.mrb[0].mxu0
      %v325 = vadd.f32 %v240, %v324
      %v326 = vpop.f32.mrb[0].mxu0
      %v327 = vpop.f32.mrb[0].mxu0
      %v328 = vpop.f32.mrb[0].mxu0
      %329 = vdwg.mxu0
      %v330 = vmax.f32 %v325, 0.0
      %v331 = vpack.c.bf16 %v330, %v330
      %332 = vst [vmem:[%s216] sm:$0xf] %v331
      %p333 = scmp.lt.s32.totalorder %s18, 1
      %s334 = scalar_select %p333, %s18, 1
      %p335 = scmp.lt.s32.totalorder %s19, 0
      %s336 = scalar_select %p335, %s19, 0
      %s337 = sadd.s32 %s336, %s334
      %s338 = smul.addr %s337, 4
      %s339 = scalar_lea.vmem %s3, %s338
      // Predicated region
      $region33: #{transformer_layer_forward.11} parent=31 // pred_check
        %p340 = pneg %p124
      $region34: #{transformer_layer_forward.11} parent=31 // pred_check_branch
        %342 = sbr.rel (%p340) target = $region36
      $region35: #{transformer_layer_forward.11} parent=31 // pred_region
        _
      $region36: #{transformer_layer_forward.11} parent=31 // pred_fallthru
        _
    $region32: #{transformer_layer_forward.11} parent=5 // pred_fallthru
      _
    %p343 = scmp.le.s32.totalorder 2, %s9
    // Predicated region
    $region37: #{transformer_layer_forward.11} parent=5 // pred_check
      %p344 = pneg %p343
    $region38: #{transformer_layer_forward.11} parent=5 // pred_check_branch
      %346 = sbr.rel (%p344) target = $region40
    $region39: #{transformer_layer_forward.11} parent=5 // pred_region
      %s347 = ssub.s32 %s9, 2
      // Predicated region
      $region41: #{transformer_layer_forward.11} parent=39 // pred_check
        %p348 = pneg %p130
      $region42: #{transformer_layer_forward.11} parent=39 // pred_check_branch
        %350 = sbr.rel (%p348) target = $region44
      $region43: #{transformer_layer_forward.11} parent=39 // pred_region
        %p351 = scmp.lt.s32.totalorder %s20, 1
        %s352 = scalar_select %p351, %s20, 1
        %p353 = scmp.lt.s32.totalorder %s21, 0
        %s354 = scalar_select %p353, %s21, 0
        %s355 = sadd.s32 %s354, %s352
        %s356 = smul.addr %s355, 4
        %s357 = scalar_lea.vmem %s3, %s356
      $region44: #{transformer_layer_forward.11} parent=39 // pred_fallthru
        _
    $region40: #{transformer_layer_forward.11} parent=5 // pred_fallthru
      _
  $region6: #{transformer_layer_forward.11} parent=0 // loop_footer
    %s13 = sadd.s32 1, %s9
  $region7: #{transformer_layer_forward.11} parent=0 // loop_footer_branch
    %8 = sbr.rel target = $region3
  $region8: #{transformer_layer_forward.11} parent=0 // loop_exit
    _

</llo_original>
